<compile_context>
chip_gen: v7x
topology: tpu7x:2x2x1
jax: 0.10.0
libtpu: 0.0.40
codegen_flags: <defaults>
</compile_context>

<pallas_src>
import functools
from math import sqrt

import jax
import jax.numpy as jnp
from jax.experimental import pallas as pl
from jax.experimental.pallas import tpu as pltpu


# ---------------------------------------------------------------------------
# Chip / VMEM helpers (generation-aware tiling)
# ---------------------------------------------------------------------------

def _chip_vmem_bytes():
    """Physical VMEM of the local chip (64 MiB v7x, 128 MiB v5e/v6e)."""
    try:
        return int(pltpu.get_tpu_info().vmem_capacity_bytes)
    except Exception:
        return 64 << 20  # conservative (v7x-sized) fallback


def _vmem_limit(bytes_est, cap):
    """Scoped-VMEM limit: estimated footprint + headroom, capped at ~80% of chip VMEM."""
    return int(min(max(bytes_est + (8 << 20), 16 << 20), int(cap * 0.8)))


def _pick_tile(dim, prefs):
    """Largest preferred tile that evenly divides `dim`, else the full dim."""
    for p in prefs:
        if dim % p == 0:
            return p
    return dim


# ---------------------------------------------------------------------------
# Tiled linear projection:  y = x @ W + b   (bf16 operands, f32 accumulation)
# ---------------------------------------------------------------------------

def _linear_kernel(x_ref, w_ref, b_ref, o_ref, acc_ref):
    # x: (TM, TK) bf16  w: (TK, TN) bf16  b: (1, TN) f32  o: (TM, TN)  acc: (TM, TN) f32
    @pl.when(pl.program_id(2) == 0)
    def _():
        acc_ref[...] = jnp.zeros_like(acc_ref)

    # bf16 operands run the MXU at native throughput; accumulation stays f32.
    acc_ref[...] += jnp.dot(x_ref[...], w_ref[...],
                            preferred_element_type=jnp.float32)

    @pl.when(pl.program_id(2) == pl.num_programs(2) - 1)
    def _():
        o_ref[...] = (acc_ref[...] + b_ref[...]).astype(o_ref.dtype)


def _linear(x2d, w, b, out_dtype):
    n, din = x2d.shape
    dout = w.shape[1]
    tm = _pick_tile(n, (512, 256, 128))
    tk = _pick_tile(din, (512, 256, 128))
    tn = _pick_tile(dout, (512, 256, 128))
    grid = (n // tm, dout // tn, din // tk)

    xb = jnp.dtype(x2d.dtype).itemsize
    wb = jnp.dtype(w.dtype).itemsize
    ob = jnp.dtype(out_dtype).itemsize
    bytes_est = (2 * (tm * tk * xb + tk * tn * wb + tn * 4 + tm * tn * ob)
                 + tm * tn * 4)
    cap = _chip_vmem_bytes()

    return pl.pallas_call(
        _linear_kernel,
        out_shape=jax.ShapeDtypeStruct((n, dout), out_dtype),
        grid_spec=pltpu.PrefetchScalarGridSpec(
            num_scalar_prefetch=0,
            grid=grid,
            in_specs=[
                pl.BlockSpec((tm, tk), lambda i, j, k: (i, k)),
                pl.BlockSpec((tk, tn), lambda i, j, k: (k, j)),
                pl.BlockSpec((1, tn), lambda i, j, k: (0, j)),
            ],
            out_specs=pl.BlockSpec((tm, tn), lambda i, j, k: (i, j)),
            scratch_shapes=[pltpu.VMEM((tm, tn), jnp.float32)],
        ),
        compiler_params=pltpu.CompilerParams(
            dimension_semantics=("parallel", "parallel", "arbitrary"),
            vmem_limit_bytes=_vmem_limit(bytes_est, cap),
        ),
    )(x2d, w, b.reshape(1, -1).astype(jnp.float32))


# ---------------------------------------------------------------------------
# Multi-head scaled dot-product attention (L tiled; heads looped in-kernel)
# ---------------------------------------------------------------------------

def _attention_kernel(n_heads, d_k, d_v, q_ref, k_ref, v_ref, o_ref, a_ref):
    # q: (1, TL, H*dk) bf16 (pre-scaled by 1/sqrt(dk) via folded Wq)
    # k: (1, S, H*dk) bf16   v: (1, S, H*dv) bf16
    # o: (1, TL, H*dv) bf16  a: (1, H, TL, S) bf16
    q = q_ref[0]
    k = k_ref[0]
    v = v_ref[0]

    outs = []
    # Per-head 2-D dots on static lane slices: no (TL, H*d) -> (TL, H, d) relayout,
    # and only one (TL, S) score slab live at a time (bounded VMEM/vreg pressure).
    # TODO(synk): switch to a lax.fori_loop over heads if H grows large (>16).
    for h in range(n_heads):
        qh = q[:, h * d_k:(h + 1) * d_k]            # (TL, dk)
        kh = k[:, h * d_k:(h + 1) * d_k]            # (S, dk)
        vh = v[:, h * d_v:(h + 1) * d_v]            # (S, dv)

        # scores = qh @ kh^T (contraction over dk) -> f32 accumulation on the MXU,
        # no transposed-K copy materialized.
        s = jax.lax.dot_general(qh, kh, (((1,), (1,)), ((), ())),
                                preferred_element_type=jnp.float32)   # (TL, S)

        # Exact softmax over the full (un-tiled) S axis, math in f32.  The EUP
        # approx reciprocal (~1e-4 rel) is below the bf16 quantization of the
        # returned attention weights.
        m = jnp.max(s, axis=-1, keepdims=True)
        p = jnp.exp(s - m)
        attn = p * pl.reciprocal(jnp.sum(p, axis=-1, keepdims=True), approx=True)

        attn_bf16 = attn.astype(jnp.bfloat16)
        a_ref[0, h] = attn_bf16.astype(a_ref.dtype)

        # P @ V with bf16 operands (flash-attention-standard precision tradeoff).
        outs.append(jnp.dot(attn_bf16, vh, preferred_element_type=jnp.float32))

    # Head merge in VMEM -> one lane-dense (H*dv wide) HBM writeback.
    o_ref[0] = jnp.concatenate(outs, axis=-1).astype(o_ref.dtype)


def _attn_bytes_est(tl, s, n_heads, d_k, d_v):
    ib = 2  # bf16 q/k/v/out/attn
    q_b = 2 * tl * n_heads * d_k * ib                        # double-buffered
    kv_b = (s * n_heads * d_k + s * n_heads * d_v) * ib      # single-buffered (Buffered(1))
    o_b = 2 * tl * n_heads * d_v * ib
    a_b = 2 * n_heads * tl * s * ib
    tmp = 4 * tl * s * 4                                     # per-head scores/exp f32 slabs
    return q_b + kv_b + o_b + a_b + tmp


def _multi_head_attention(q, k, v, n_heads, d_k, d_v, attn_dtype=jnp.bfloat16):
    # q: (B, L, H*dk)  k: (B, S, H*dk)  v: (B, S, H*dv), all bf16
    B, L, _ = q.shape
    S = k.shape[1]

    cap = _chip_vmem_bytes()
    budget = int(cap * 0.7)
    cands = [t for t in (512, 256, 128, 64, 32, 16, 8) if L % t == 0] or [L]
    tl = cands[-1]
    for t in cands:  # largest L-tile that fits the chip's VMEM budget
        if _attn_bytes_est(t, S, n_heads, d_k, d_v) <= budget:
            tl = t
            break
    # TODO(synk): tile S flash-style (online softmax) if even the smallest TL overflows
    # the VMEM budget at very long S.

    grid = (B, L // tl)
    bytes_est = _attn_bytes_est(tl, S, n_heads, d_k, d_v)

    out, attn = pl.pallas_call(
        functools.partial(_attention_kernel, n_heads, d_k, d_v),
        out_shape=(
            jax.ShapeDtypeStruct((B, L, n_heads * d_v), jnp.bfloat16),
            jax.ShapeDtypeStruct((B, n_heads, L, S), attn_dtype),
        ),
        grid_spec=pltpu.PrefetchScalarGridSpec(
            num_scalar_prefetch=0,
            grid=grid,
            in_specs=[
                pl.BlockSpec((1, tl, n_heads * d_k), lambda b, l: (b, l, 0)),
                # K/V index maps are constant over the inner l axis -> single-buffer
                # them instead of paying 2x full-S VMEM copies.
                pl.BlockSpec((1, S, n_heads * d_k), lambda b, l: (b, 0, 0),
                             pipeline_mode=pl.Buffered(1)),
                pl.BlockSpec((1, S, n_heads * d_v), lambda b, l: (b, 0, 0),
                             pipeline_mode=pl.Buffered(1)),
            ],
            out_specs=[
                pl.BlockSpec((1, tl, n_heads * d_v), lambda b, l: (b, l, 0)),
                pl.BlockSpec((1, n_heads, tl, S), lambda b, l: (b, 0, l, 0)),
            ],
        ),
        compiler_params=pltpu.CompilerParams(
            # Batch is the leading parallel axis (keeps per-core K/V resident on v7x
            # megacore); l is also independent, so it can be split when B is small.
            dimension_semantics=("parallel", "parallel"),
            vmem_limit_bytes=_vmem_limit(bytes_est, cap),
        ),
    )(q, k, v)
    return out, attn


# ---------------------------------------------------------------------------
# AttentionLayer forward (glue in plain JAX, hot paths in Pallas)
# ---------------------------------------------------------------------------

def attention_layer_forward(params, queries, keys, values,
                            instruct_mask=None, ts_mask=None, *, n_heads,
                            attn_dtype=jnp.bfloat16):
    """Reproduces AttentionLayer.forward.

    queries: (B, L, d_model), keys/values: (B, S, d_model)
    Returns (out, attn) with out: (B, L, d_model) f32, attn: (B, H, L, S) `attn_dtype`.
    `n_heads` must be a static Python int (jit with static_argnames=("n_heads",)).
    """
    del instruct_mask, ts_mask  # see TODO(synk) at top of file
    B, L, d_model = queries.shape
    S = keys.shape[1]
    H = n_heads
    d_k = params["Wq"].shape[1] // H
    d_v = params["Wv"].shape[1] // H
    scale = 1.0 / sqrt(d_k)

    # Fold the 1/sqrt(d_k) scale into the query projection (one-time XLA constant op),
    # then cast all matmul operands to bf16 for native MXU throughput; biases stay f32.
    cdt = jnp.bfloat16
    Wq = (params["Wq"] * scale).astype(cdt)
    bq = params["bq"] * scale
    Wk = params["Wk"].astype(cdt)
    Wv = params["Wv"].astype(cdt)
    Wo = params["Wo"].astype(cdt)

    q_in = queries.reshape(B * L, d_model).astype(cdt)
    k_in = keys.reshape(B * S, d_model).astype(cdt)
    v_in = values.reshape(B * S, d_model).astype(cdt)

    # Projections (tiled Pallas matmul kernels, bf16 intermediates between calls).
    q = _linear(q_in, Wq, bq, out_dtype=cdt)                    # (B*L, H*dk)
    k = _linear(k_in, Wk, params["bk"], out_dtype=cdt)          # (B*S, H*dk)
    v = _linear(v_in, Wv, params["bv"], out_dtype=cdt)          # (B*S, H*dv)

    # No (B,H,L,E) HBM transposes: q/k/v stay (B, seq, H*d); the head split is done
    # inside the attention kernel via static lane slices.
    out, attn = _multi_head_attention(
        q.reshape(B, L, H * d_k),
        k.reshape(B, S, H * d_k),
        v.reshape(B, S, H * d_v),
        H, d_k, d_v, attn_dtype=attn_dtype)                     # (B,L,H*dv), (B,H,L,S)

    out = _linear(out.reshape(B * L, H * d_v), Wo, params["bo"],
                  out_dtype=jnp.float32)
    return out.reshape(B, L, d_model), attn


# ---------------------------------------------------------------------------
# Deterministic parameter initialization (matches nn.Linear shapes, kept f32)
# ---------------------------------------------------------------------------

def init_params(key, d_model, n_heads, d_keys=None, d_values=None):
    d_keys = d_keys or d_model // n_heads
    d_values = d_values or d_model // n_heads
    ks = jax.random.split(key, 8)

    def lin(kw, kb, fan_in, fan_out):
        bound = 1.0 / sqrt(fan_in)
        w = jax.random.uniform(kw, (fan_in, fan_out), jnp.float32, -bound, bound)
        b = jax.random.uniform(kb, (fan_out,), jnp.float32, -bound, bound)
        return w, b

    Wq, bq = lin(ks[0], ks[1], d_model, d_keys * n_heads)
    Wk, bk = lin(ks[2], ks[3], d_model, d_keys * n_heads)
    Wv, bv = lin(ks[4], ks[5], d_model, d_values * n_heads)
    Wo, bo = lin(ks[6], ks[7], d_values * n_heads, d_model)
    return dict(Wq=Wq, bq=bq, Wk=Wk, bk=bk, Wv=Wv, bv=bv, Wo=Wo, bo=bo)


# ---------------------------------------------------------------------------
# Pure-JAX f32 reference (for a sanity check)
# ---------------------------------------------------------------------------

def _reference_forward(params, queries, keys, values, n_heads):
    B, L, d_model = queries.shape
    S = keys.shape[1]
    H = n_heads
    q = queries.reshape(-1, d_model) @ params["Wq"] + params["bq"]
    k = keys.reshape(-1, d_model) @ params["Wk"] + params["bk"]
    v = values.reshape(-1, d_model) @ params["Wv"] + params["bv"]
    d_k = q.shape[-1] // H
    d_v = v.shape[-1] // H
    q = q.reshape(B, L, H, d_k)
    k = k.reshape(B, S, H, d_k)
    v = v.reshape(B, S, H, d_v)
    scores = jnp.einsum("blhe,bshe->bhls", q, k) * (1.0 / sqrt(d_k))
    attn = jax.nn.softmax(scores, axis=-1)
    out = jnp.einsum("bhls,bshd->blhd", attn, v).reshape(B, L, H * d_v)
    out = (out @ params["Wo"] + params["bo"]).reshape(B, L, d_model)
    return out, attn


# ---------------------------------------------------------------------------

if __name__ == "__main__":
    B, L, S = 2, 8, 8
    d_model, n_heads = 32, 4

    key = jax.random.PRNGKey(0)
    kp, kq, kk, kv = jax.random.split(key, 4)

    params = init_params(kp, d_model, n_heads)
    queries = jax.random.normal(kq, (B, L, d_model), jnp.float32)
    keys = jax.random.normal(kk, (B, S, d_model), jnp.float32)
    values = jax.random.normal(kv, (B, S, d_model), jnp.float32)

    fwd = jax.jit(attention_layer_forward, static_argnames=("n_heads",))
    out, attn = fwd(params, queries, keys, values, n_heads=n_heads)
    jax.block_until_ready((out, attn))

    assert out.shape == (B, L, d_model) and out.dtype == jnp.float32
    assert attn.shape == (B, n_heads, L, S)

    # Sanity check against a pure-f32 JAX reference.  bf16 MXU operands + bf16 attention
    # weights give ~1e-2 absolute error at these magnitudes, so tolerances are generous.
    ref_out, ref_attn = _reference_forward(params, queries, keys, values, n_heads)
    out_err = float(jnp.max(jnp.abs(out - ref_out)))
    attn_err = float(jnp.max(jnp.abs(attn.astype(jnp.float32) - ref_attn)))
    assert out_err < 1e-1, f"out max abs err {out_err}"
    assert attn_err < 5e-2, f"attn max abs err {attn_err}"

    print("KERNEL_OK")
</pallas_src>

<mosaic_0001>
module attributes {stable_mosaic.version = 11 : i64} {
  func.func @_linear_kernel(%arg0: i32, %arg1: i32, %arg2: i32, %arg3: memref<16x32xbf16, #tpu.memory_space<vmem>>, %arg4: memref<32x32xbf16, #tpu.memory_space<vmem>>, %arg5: memref<1x32xf32, #tpu.memory_space<vmem>>, %arg6: memref<16x32xbf16, #tpu.memory_space<vmem>>, %arg7: memref<16x32xf32, #tpu.memory_space<vmem>>) attributes {dimension_semantics = [#tpu.dimension_semantics<parallel>, #tpu.dimension_semantics<parallel>, #tpu.dimension_semantics<arbitrary>], iteration_bounds = array<i64: 1, 1, 1>, scalar_prefetch = 0 : i64, scratch_operands = 1 : i64, tpu.core_type = #tpu.core_type<tc>, window_params = [{transform_indices = @transform_0, window_bounds = array<i64: 16, 32>}, {transform_indices = @transform_1, window_bounds = array<i64: 32, 32>}, {transform_indices = @transform_2, window_bounds = array<i64: 1, 32>}, {transform_indices = @transform_3, window_bounds = array<i64: 16, 32>}]} {
    %c0_i32 = arith.constant 0 : i32
    %0 = arith.cmpi eq, %arg2, %c0_i32 : i32
    %1 = arith.extui %0 : i1 to i32
    %c0_i32_0 = arith.constant 0 : i32
    %2 = arith.cmpi ne, %1, %c0_i32_0 : i32
    scf.if %2 {
      %cst_10 = arith.constant 0.000000e+00 : f32
      %12 = vector.broadcast %cst_10 : f32 to vector<16x32xf32>
      %c0_11 = arith.constant 0 : index
      %c0_12 = arith.constant 0 : index
      %13 = vector.load %arg7[%c0_11, %c0_12] : memref<16x32xf32, #tpu.memory_space<vmem>>, vector<16x32xf32>
      tpu.vector_store %arg7[%c0_11, %c0_12], %12 {strides = array<i32>} : memref<16x32xf32, #tpu.memory_space<vmem>>, vector<16x32xf32>,
    } else {
    }
    %c0 = arith.constant 0 : index
    %c0_1 = arith.constant 0 : index
    %3 = vector.load %arg7[%c0, %c0_1] : memref<16x32xf32, #tpu.memory_space<vmem>>, vector<16x32xf32>
    %c0_2 = arith.constant 0 : index
    %c0_3 = arith.constant 0 : index
    %4 = vector.load %arg3[%c0_2, %c0_3] : memref<16x32xbf16, #tpu.memory_space<vmem>>, vector<16x32xbf16>
    %c0_4 = arith.constant 0 : index
    %c0_5 = arith.constant 0 : index
    %5 = vector.load %arg4[%c0_4, %c0_5] : memref<32x32xbf16, #tpu.memory_space<vmem>>, vector<32x32xbf16>
    %cst = arith.constant dense<0.000000e+00> : vector<16x32xf32>
    %6 = tpu.matmul %4, %5, %cst {dimension_numbers = #tpu.dot_dimension_numbers<[1], [0], [0], [1], [0, 0, 1, 1], [], []>} : vector<16x32xbf16>, vector<32x32xbf16>, vector<16x32xf32> -> vector<16x32xf32>
    %7 = arith.addf %3, %6 : vector<16x32xf32>
    %c0_6 = arith.constant 0 : index
    %c0_7 = arith.constant 0 : index
    %8 = vector.load %arg7[%c0_6, %c0_7] : memref<16x32xf32, #tpu.memory_space<vmem>>, vector<16x32xf32>
    tpu.vector_store %arg7[%c0_6, %c0_7], %7 {strides = array<i32>} : memref<16x32xf32, #tpu.memory_space<vmem>>, vector<16x32xf32>,
    %c0_i32_8 = arith.constant 0 : i32
    %9 = arith.cmpi eq, %arg2, %c0_i32_8 : i32
    %10 = arith.extui %9 : i1 to i32
    %c0_i32_9 = arith.constant 0 : i32
    %11 = arith.cmpi ne, %10, %c0_i32_9 : i32
    scf.if %11 {
      %c0_10 = arith.constant 0 : index
      %c0_11 = arith.constant 0 : index
      %12 = vector.load %arg7[%c0_10, %c0_11] : memref<16x32xf32, #tpu.memory_space<vmem>>, vector<16x32xf32>
      %c0_12 = arith.constant 0 : index
      %c0_13 = arith.constant 0 : index
      %13 = vector.load %arg5[%c0_12, %c0_13] : memref<1x32xf32, #tpu.memory_space<vmem>>, vector<1x32xf32>
      %14 = vector.broadcast %13 : vector<1x32xf32> to vector<16x32xf32>
      %15 = arith.addf %12, %14 : vector<16x32xf32>
      %16 = arith.truncf %15 : vector<16x32xf32> to vector<16x32xbf16>
      %c0_14 = arith.constant 0 : index
      %c0_15 = arith.constant 0 : index
      %17 = vector.load %arg6[%c0_14, %c0_15] : memref<16x32xbf16, #tpu.memory_space<vmem>>, vector<16x32xbf16>
      tpu.vector_store %arg6[%c0_14, %c0_15], %16 {strides = array<i32>} : memref<16x32xbf16, #tpu.memory_space<vmem>>, vector<16x32xbf16>,
    } else {
    }
    return
  }
  func.func @transform_0(%arg0: i32, %arg1: i32, %arg2: i32) -> (i32, i32) {
    %c0_i32 = arith.constant 0 : i32
    return %arg0, %arg2 : i32, i32
  }
  func.func @transform_1(%arg0: i32, %arg1: i32, %arg2: i32) -> (i32, i32) {
    %c0_i32 = arith.constant 0 : i32
    return %arg2, %arg1 : i32, i32
  }
  func.func @transform_2(%arg0: i32, %arg1: i32, %arg2: i32) -> (i32, i32) {
    %c0_i32 = arith.constant 0 : i32
    %c0_i32_0 = arith.constant 0 : i32
    return %c0_i32, %arg1 : i32, i32
  }
  func.func @transform_3(%arg0: i32, %arg1: i32, %arg2: i32) -> (i32, i32) {
    %c0_i32 = arith.constant 0 : i32
    return %arg0, %arg1 : i32, i32
  }
}

module attributes {stable_mosaic.version = 11 : i64} {
  func.func @_linear_kernel(%arg0: i32, %arg1: i32, %arg2: i32, %arg3: memref<16x32xbf16, #tpu.memory_space<vmem>>, %arg4: memref<32x32xbf16, #tpu.memory_space<vmem>>, %arg5: memref<1x32xf32, #tpu.memory_space<vmem>>, %arg6: memref<16x32xf32, #tpu.memory_space<vmem>>, %arg7: memref<16x32xf32, #tpu.memory_space<vmem>>) attributes {dimension_semantics = [#tpu.dimension_semantics<parallel>, #tpu.dimension_semantics<parallel>, #tpu.dimension_semantics<arbitrary>], iteration_bounds = array<i64: 1, 1, 1>, scalar_prefetch = 0 : i64, scratch_operands = 1 : i64, tpu.core_type = #tpu.core_type<tc>, window_params = [{transform_indices = @transform_0, window_bounds = array<i64: 16, 32>}, {transform_indices = @transform_1, window_bounds = array<i64: 32, 32>}, {transform_indices = @transform_2, window_bounds = array<i64: 1, 32>}, {transform_indices = @transform_3, window_bounds = array<i64: 16, 32>}]} {
    %c0_i32 = arith.constant 0 : i32
    %0 = arith.cmpi eq, %arg2, %c0_i32 : i32
    %1 = arith.extui %0 : i1 to i32
    %c0_i32_0 = arith.constant 0 : i32
    %2 = arith.cmpi ne, %1, %c0_i32_0 : i32
    scf.if %2 {
      %cst_10 = arith.constant 0.000000e+00 : f32
      %12 = vector.broadcast %cst_10 : f32 to vector<16x32xf32>
      %c0_11 = arith.constant 0 : index
      %c0_12 = arith.constant 0 : index
      %13 = vector.load %arg7[%c0_11, %c0_12] : memref<16x32xf32, #tpu.memory_space<vmem>>, vector<16x32xf32>
      tpu.vector_store %arg7[%c0_11, %c0_12], %12 {strides = array<i32>} : memref<16x32xf32, #tpu.memory_space<vmem>>, vector<16x32xf32>,
    } else {
    }
    %c0 = arith.constant 0 : index
    %c0_1 = arith.constant 0 : index
    %3 = vector.load %arg7[%c0, %c0_1] : memref<16x32xf32, #tpu.memory_space<vmem>>, vector<16x32xf32>
    %c0_2 = arith.constant 0 : index
    %c0_3 = arith.constant 0 : index
    %4 = vector.load %arg3[%c0_2, %c0_3] : memref<16x32xbf16, #tpu.memory_space<vmem>>, vector<16x32xbf16>
    %c0_4 = arith.constant 0 : index
    %c0_5 = arith.constant 0 : index
    %5 = vector.load %arg4[%c0_4, %c0_5] : memref<32x32xbf16, #tpu.memory_space<vmem>>, vector<32x32xbf16>
    %cst = arith.constant dense<0.000000e+00> : vector<16x32xf32>
    %6 = tpu.matmul %4, %5, %cst {dimension_numbers = #tpu.dot_dimension_numbers<[1], [0], [0], [1], [0, 0, 1, 1], [], []>} : vector<16x32xbf16>, vector<32x32xbf16>, vector<16x32xf32> -> vector<16x32xf32>
    %7 = arith.addf %3, %6 : vector<16x32xf32>
    %c0_6 = arith.constant 0 : index
    %c0_7 = arith.constant 0 : index
    %8 = vector.load %arg7[%c0_6, %c0_7] : memref<16x32xf32, #tpu.memory_space<vmem>>, vector<16x32xf32>
    tpu.vector_store %arg7[%c0_6, %c0_7], %7 {strides = array<i32>} : memref<16x32xf32, #tpu.memory_space<vmem>>, vector<16x32xf32>,
    %c0_i32_8 = arith.constant 0 : i32
    %9 = arith.cmpi eq, %arg2, %c0_i32_8 : i32
    %10 = arith.extui %9 : i1 to i32
    %c0_i32_9 = arith.constant 0 : i32
    %11 = arith.cmpi ne, %10, %c0_i32_9 : i32
    scf.if %11 {
      %c0_10 = arith.constant 0 : index
      %c0_11 = arith.constant 0 : index
      %12 = vector.load %arg7[%c0_10, %c0_11] : memref<16x32xf32, #tpu.memory_space<vmem>>, vector<16x32xf32>
      %c0_12 = arith.constant 0 : index
      %c0_13 = arith.constant 0 : index
      %13 = vector.load %arg5[%c0_12, %c0_13] : memref<1x32xf32, #tpu.memory_space<vmem>>, vector<1x32xf32>
      %14 = vector.broadcast %13 : vector<1x32xf32> to vector<16x32xf32>
      %15 = arith.addf %12, %14 : vector<16x32xf32>
      %c0_14 = arith.constant 0 : index
      %c0_15 = arith.constant 0 : index
      %16 = vector.load %arg6[%c0_14, %c0_15] : memref<16x32xf32, #tpu.memory_space<vmem>>, vector<16x32xf32>
      tpu.vector_store %arg6[%c0_14, %c0_15], %15 {strides = array<i32>} : memref<16x32xf32, #tpu.memory_space<vmem>>, vector<16x32xf32>,
    } else {
    }
    return
  }
  func.func @transform_0(%arg0: i32, %arg1: i32, %arg2: i32) -> (i32, i32) {
    %c0_i32 = arith.constant 0 : i32
    return %arg0, %arg2 : i32, i32
  }
  func.func @transform_1(%arg0: i32, %arg1: i32, %arg2: i32) -> (i32, i32) {
    %c0_i32 = arith.constant 0 : i32
    return %arg2, %arg1 : i32, i32
  }
  func.func @transform_2(%arg0: i32, %arg1: i32, %arg2: i32) -> (i32, i32) {
    %c0_i32 = arith.constant 0 : i32
    %c0_i32_0 = arith.constant 0 : i32
    return %c0_i32, %arg1 : i32, i32
  }
  func.func @transform_3(%arg0: i32, %arg1: i32, %arg2: i32) -> (i32, i32) {
    %c0_i32 = arith.constant 0 : i32
    return %arg0, %arg1 : i32, i32
  }
}

module attributes {stable_mosaic.version = 11 : i64} {
  func.func @_attention_kernel(%arg0: i32, %arg1: i32, %arg2: memref<1x8x32xbf16, #tpu.memory_space<vmem>>, %arg3: memref<1x8x32xbf16, #tpu.memory_space<vmem>>, %arg4: memref<1x8x32xbf16, #tpu.memory_space<vmem>>, %arg5: memref<1x8x32xbf16, #tpu.memory_space<vmem>>, %arg6: memref<1x4x8x8xbf16, #tpu.memory_space<vmem>>) attributes {dimension_semantics = [#tpu.dimension_semantics<parallel>, #tpu.dimension_semantics<parallel>], iteration_bounds = array<i64: 2, 1>, scalar_prefetch = 0 : i64, scratch_operands = 0 : i64, tpu.core_type = #tpu.core_type<tc>, window_params = [{transform_indices = @transform_0, window_bounds = array<i64: 1, 8, 32>}, {pipeline_mode = #tpu.pipeline_mode<synchronous>, transform_indices = @transform_1, window_bounds = array<i64: 1, 8, 32>}, {pipeline_mode = #tpu.pipeline_mode<synchronous>, transform_indices = @transform_2, window_bounds = array<i64: 1, 8, 32>}, {transform_indices = @transform_3, window_bounds = array<i64: 1, 8, 32>}, {transform_indices = @transform_4, window_bounds = array<i64: 1, 4, 8, 8>}]} {
    %c0 = arith.constant 0 : index
    %c0_0 = arith.constant 0 : index
    %c0_1 = arith.constant 0 : index
    %0 = vector.load %arg2[%c0, %c0_0, %c0_1] : memref<1x8x32xbf16, #tpu.memory_space<vmem>>, vector<1x8x32xbf16>
    %1 = vector.shape_cast %0 : vector<1x8x32xbf16> to vector<8x32xbf16>
    %c0_2 = arith.constant 0 : index
    %c0_3 = arith.constant 0 : index
    %c0_4 = arith.constant 0 : index
    %2 = vector.load %arg3[%c0_2, %c0_3, %c0_4] : memref<1x8x32xbf16, #tpu.memory_space<vmem>>, vector<1x8x32xbf16>
    %3 = vector.shape_cast %2 : vector<1x8x32xbf16> to vector<8x32xbf16>
    %c0_5 = arith.constant 0 : index
    %c0_6 = arith.constant 0 : index
    %c0_7 = arith.constant 0 : index
    %4 = vector.load %arg4[%c0_5, %c0_6, %c0_7] : memref<1x8x32xbf16, #tpu.memory_space<vmem>>, vector<1x8x32xbf16>
    %5 = vector.shape_cast %4 : vector<1x8x32xbf16> to vector<8x32xbf16>
    %6 = vector.extract_strided_slice %1 {offsets = [0, 0], sizes = [8, 8], strides = [1, 1]} : vector<8x32xbf16> to vector<8x8xbf16>
    %7 = vector.extract_strided_slice %3 {offsets = [0, 0], sizes = [8, 8], strides = [1, 1]} : vector<8x32xbf16> to vector<8x8xbf16>
    %8 = vector.extract_strided_slice %5 {offsets = [0, 0], sizes = [8, 8], strides = [1, 1]} : vector<8x32xbf16> to vector<8x8xbf16>
    %cst = arith.constant dense<0.000000e+00> : vector<8x8xf32>
    %9 = tpu.matmul %6, %7, %cst {dimension_numbers = #tpu.dot_dimension_numbers<[1], [1], [0], [0], [0, 0, 1, 0], [], []>} : vector<8x8xbf16>, vector<8x8xbf16>, vector<8x8xf32> -> vector<8x8xf32>
    %cst_8 = arith.constant dense<0xFF800000> : vector<8xf32>
    %10 = vector.multi_reduction <maximumf>, %9, %cst_8 [1] : vector<8x8xf32> to vector<8xf32>
    %11 = vector.shape_cast %10 : vector<8xf32> to vector<8x1xf32>
    %12 = vector.broadcast %11 : vector<8x1xf32> to vector<8x8xf32>
    %13 = arith.subf %9, %12 : vector<8x8xf32>
    %14 = math.exp %13 : vector<8x8xf32>
    %cst_9 = arith.constant dense<0.000000e+00> : vector<8xf32>
    %15 = vector.multi_reduction <add>, %14, %cst_9 [1] : vector<8x8xf32> to vector<8xf32>
    %16 = vector.shape_cast %15 : vector<8xf32> to vector<8x1xf32>
    %17 = tpu.reciprocal %16 {approx = true} : vector<8x1xf32> -> vector<8x1xf32>
    %18 = vector.broadcast %17 : vector<8x1xf32> to vector<8x8xf32>
    %19 = arith.mulf %14, %18 : vector<8x8xf32>
    %20 = arith.truncf %19 : vector<8x8xf32> to vector<8x8xbf16>
    %c0_10 = arith.constant 0 : index
    %c0_11 = arith.constant 0 : index
    %c0_12 = arith.constant 0 : index
    %c0_13 = arith.constant 0 : index
    %21 = vector.load %arg6[%c0_10, %c0_11, %c0_12, %c0_13] : memref<1x4x8x8xbf16, #tpu.memory_space<vmem>>, vector<1x1x8x8xbf16>
    %22 = vector.shape_cast %21 : vector<1x1x8x8xbf16> to vector<8x8xbf16>
    %23 = vector.shape_cast %20 : vector<8x8xbf16> to vector<1x1x8x8xbf16>
    tpu.vector_store %arg6[%c0_10, %c0_11, %c0_12, %c0_13], %23 {strides = array<i32>} : memref<1x4x8x8xbf16, #tpu.memory_space<vmem>>, vector<1x1x8x8xbf16>,
    %cst_14 = arith.constant dense<0.000000e+00> : vector<8x8xf32>
    %24 = tpu.matmul %20, %8, %cst_14 {dimension_numbers = #tpu.dot_dimension_numbers<[1], [0], [0], [1], [0, 0, 1, 1], [], []>} : vector<8x8xbf16>, vector<8x8xbf16>, vector<8x8xf32> -> vector<8x8xf32>
    %25 = vector.extract_strided_slice %1 {offsets = [0, 8], sizes = [8, 8], strides = [1, 1]} : vector<8x32xbf16> to vector<8x8xbf16>
    %26 = vector.extract_strided_slice %3 {offsets = [0, 8], sizes = [8, 8], strides = [1, 1]} : vector<8x32xbf16> to vector<8x8xbf16>
    %27 = vector.extract_strided_slice %5 {offsets = [0, 8], sizes = [8, 8], strides = [1, 1]} : vector<8x32xbf16> to vector<8x8xbf16>
    %cst_15 = arith.constant dense<0.000000e+00> : vector<8x8xf32>
    %28 = tpu.matmul %25, %26, %cst_15 {dimension_numbers = #tpu.dot_dimension_numbers<[1], [1], [0], [0], [0, 0, 1, 0], [], []>} : vector<8x8xbf16>, vector<8x8xbf16>, vector<8x8xf32> -> vector<8x8xf32>
    %cst_16 = arith.constant dense<0xFF800000> : vector<8xf32>
    %29 = vector.multi_reduction <maximumf>, %28, %cst_16 [1] : vector<8x8xf32> to vector<8xf32>
    %30 = vector.shape_cast %29 : vector<8xf32> to vector<8x1xf32>
    %31 = vector.broadcast %30 : vector<8x1xf32> to vector<8x8xf32>
    %32 = arith.subf %28, %31 : vector<8x8xf32>
    %33 = math.exp %32 : vector<8x8xf32>
    %cst_17 = arith.constant dense<0.000000e+00> : vector<8xf32>
    %34 = vector.multi_reduction <add>, %33, %cst_17 [1] : vector<8x8xf32> to vector<8xf32>
    %35 = vector.shape_cast %34 : vector<8xf32> to vector<8x1xf32>
    %36 = tpu.reciprocal %35 {approx = true} : vector<8x1xf32> -> vector<8x1xf32>
    %37 = vector.broadcast %36 : vector<8x1xf32> to vector<8x8xf32>
    %38 = arith.mulf %33, %37 : vector<8x8xf32>
    %39 = arith.truncf %38 : vector<8x8xf32> to vector<8x8xbf16>
    %c0_18 = arith.constant 0 : index
    %c1 = arith.constant 1 : index
    %c0_19 = arith.constant 0 : index
    %c0_20 = arith.constant 0 : index
    %40 = vector.load %arg6[%c0_18, %c1, %c0_19, %c0_20] : memref<1x4x8x8xbf16, #tpu.memory_space<vmem>>, vector<1x1x8x8xbf16>
    %41 = vector.shape_cast %40 : vector<1x1x8x8xbf16> to vector<8x8xbf16>
    %42 = vector.shape_cast %39 : vector<8x8xbf16> to vector<1x1x8x8xbf16>
    tpu.vector_store %arg6[%c0_18, %c1, %c0_19, %c0_20], %42 {strides = array<i32>} : memref<1x4x8x8xbf16, #tpu.memory_space<vmem>>, vector<1x1x8x8xbf16>,
    %cst_21 = arith.constant dense<0.000000e+00> : vector<8x8xf32>
    %43 = tpu.matmul %39, %27, %cst_21 {dimension_numbers = #tpu.dot_dimension_numbers<[1], [0], [0], [1], [0, 0, 1, 1], [], []>} : vector<8x8xbf16>, vector<8x8xbf16>, vector<8x8xf32> -> vector<8x8xf32>
    %44 = vector.extract_strided_slice %1 {offsets = [0, 16], sizes = [8, 8], strides = [1, 1]} : vector<8x32xbf16> to vector<8x8xbf16>
    %45 = vector.extract_strided_slice %3 {offsets = [0, 16], sizes = [8, 8], strides = [1, 1]} : vector<8x32xbf16> to vector<8x8xbf16>
    %46 = vector.extract_strided_slice %5 {offsets = [0, 16], sizes = [8, 8], strides = [1, 1]} : vector<8x32xbf16> to vector<8x8xbf16>
    %cst_22 = arith.constant dense<0.000000e+00> : vector<8x8xf32>
    %47 = tpu.matmul %44, %45, %cst_22 {dimension_numbers = #tpu.dot_dimension_numbers<[1], [1], [0], [0], [0, 0, 1, 0], [], []>} : vector<8x8xbf16>, vector<8x8xbf16>, vector<8x8xf32> -> vector<8x8xf32>
    %cst_23 = arith.constant dense<0xFF800000> : vector<8xf32>
    %48 = vector.multi_reduction <maximumf>, %47, %cst_23 [1] : vector<8x8xf32> to vector<8xf32>
    %49 = vector.shape_cast %48 : vector<8xf32> to vector<8x1xf32>
    %50 = vector.broadcast %49 : vector<8x1xf32> to vector<8x8xf32>
    %51 = arith.subf %47, %50 : vector<8x8xf32>
    %52 = math.exp %51 : vector<8x8xf32>
    %cst_24 = arith.constant dense<0.000000e+00> : vector<8xf32>
    %53 = vector.multi_reduction <add>, %52, %cst_24 [1] : vector<8x8xf32> to vector<8xf32>
    %54 = vector.shape_cast %53 : vector<8xf32> to vector<8x1xf32>
    %55 = tpu.reciprocal %54 {approx = true} : vector<8x1xf32> -> vector<8x1xf32>
    %56 = vector.broadcast %55 : vector<8x1xf32> to vector<8x8xf32>
    %57 = arith.mulf %52, %56 : vector<8x8xf32>
    %58 = arith.truncf %57 : vector<8x8xf32> to vector<8x8xbf16>
    %c0_25 = arith.constant 0 : index
    %c2 = arith.constant 2 : index
    %c0_26 = arith.constant 0 : index
    %c0_27 = arith.constant 0 : index
    %59 = vector.load %arg6[%c0_25, %c2, %c0_26, %c0_27] : memref<1x4x8x8xbf16, #tpu.memory_space<vmem>>, vector<1x1x8x8xbf16>
    %60 = vector.shape_cast %59 : vector<1x1x8x8xbf16> to vector<8x8xbf16>
    %61 = vector.shape_cast %58 : vector<8x8xbf16> to vector<1x1x8x8xbf16>
    tpu.vector_store %arg6[%c0_25, %c2, %c0_26, %c0_27], %61 {strides = array<i32>} : memref<1x4x8x8xbf16, #tpu.memory_space<vmem>>, vector<1x1x8x8xbf16>,
    %cst_28 = arith.constant dense<0.000000e+00> : vector<8x8xf32>
    %62 = tpu.matmul %58, %46, %cst_28 {dimension_numbers = #tpu.dot_dimension_numbers<[1], [0], [0], [1], [0, 0, 1, 1], [], []>} : vector<8x8xbf16>, vector<8x8xbf16>, vector<8x8xf32> -> vector<8x8xf32>
    %63 = vector.extract_strided_slice %1 {offsets = [0, 24], sizes = [8, 8], strides = [1, 1]} : vector<8x32xbf16> to vector<8x8xbf16>
    %64 = vector.extract_strided_slice %3 {offsets = [0, 24], sizes = [8, 8], strides = [1, 1]} : vector<8x32xbf16> to vector<8x8xbf16>
    %65 = vector.extract_strided_slice %5 {offsets = [0, 24], sizes = [8, 8], strides = [1, 1]} : vector<8x32xbf16> to vector<8x8xbf16>
    %cst_29 = arith.constant dense<0.000000e+00> : vector<8x8xf32>
    %66 = tpu.matmul %63, %64, %cst_29 {dimension_numbers = #tpu.dot_dimension_numbers<[1], [1], [0], [0], [0, 0, 1, 0], [], []>} : vector<8x8xbf16>, vector<8x8xbf16>, vector<8x8xf32> -> vector<8x8xf32>
    %cst_30 = arith.constant dense<0xFF800000> : vector<8xf32>
    %67 = vector.multi_reduction <maximumf>, %66, %cst_30 [1] : vector<8x8xf32> to vector<8xf32>
    %68 = vector.shape_cast %67 : vector<8xf32> to vector<8x1xf32>
    %69 = vector.broadcast %68 : vector<8x1xf32> to vector<8x8xf32>
    %70 = arith.subf %66, %69 : vector<8x8xf32>
    %71 = math.exp %70 : vector<8x8xf32>
    %cst_31 = arith.constant dense<0.000000e+00> : vector<8xf32>
    %72 = vector.multi_reduction <add>, %71, %cst_31 [1] : vector<8x8xf32> to vector<8xf32>
    %73 = vector.shape_cast %72 : vector<8xf32> to vector<8x1xf32>
    %74 = tpu.reciprocal %73 {approx = true} : vector<8x1xf32> -> vector<8x1xf32>
    %75 = vector.broadcast %74 : vector<8x1xf32> to vector<8x8xf32>
    %76 = arith.mulf %71, %75 : vector<8x8xf32>
    %77 = arith.truncf %76 : vector<8x8xf32> to vector<8x8xbf16>
    %c0_32 = arith.constant 0 : index
    %c3 = arith.constant 3 : index
    %c0_33 = arith.constant 0 : index
    %c0_34 = arith.constant 0 : index
    %78 = vector.load %arg6[%c0_32, %c3, %c0_33, %c0_34] : memref<1x4x8x8xbf16, #tpu.memory_space<vmem>>, vector<1x1x8x8xbf16>
    %79 = vector.shape_cast %78 : vector<1x1x8x8xbf16> to vector<8x8xbf16>
    %80 = vector.shape_cast %77 : vector<8x8xbf16> to vector<1x1x8x8xbf16>
    tpu.vector_store %arg6[%c0_32, %c3, %c0_33, %c0_34], %80 {strides = array<i32>} : memref<1x4x8x8xbf16, #tpu.memory_space<vmem>>, vector<1x1x8x8xbf16>,
    %cst_35 = arith.constant dense<0.000000e+00> : vector<8x8xf32>
    %81 = tpu.matmul %77, %65, %cst_35 {dimension_numbers = #tpu.dot_dimension_numbers<[1], [0], [0], [1], [0, 0, 1, 1], [], []>} : vector<8x8xbf16>, vector<8x8xbf16>, vector<8x8xf32> -> vector<8x8xf32>
    %82 = tpu.concatenate %24, %43, %62, %81 in 1 : vector<8x8xf32>, vector<8x8xf32>, vector<8x8xf32>, vector<8x8xf32> -> vector<8x32xf32>
    %83 = arith.truncf %82 : vector<8x32xf32> to vector<8x32xbf16>
    %c0_36 = arith.constant 0 : index
    %c0_37 = arith.constant 0 : index
    %c0_38 = arith.constant 0 : index
    %84 = vector.load %arg5[%c0_36, %c0_37, %c0_38] : memref<1x8x32xbf16, #tpu.memory_space<vmem>>, vector<1x8x32xbf16>
    %85 = vector.shape_cast %84 : vector<1x8x32xbf16> to vector<8x32xbf16>
    %86 = vector.shape_cast %83 : vector<8x32xbf16> to vector<1x8x32xbf16>
    tpu.vector_store %arg5[%c0_36, %c0_37, %c0_38], %86 {strides = array<i32>} : memref<1x8x32xbf16, #tpu.memory_space<vmem>>, vector<1x8x32xbf16>,
    return
  }
  func.func @transform_0(%arg0: i32, %arg1: i32) -> (i32, i32, i32) {
    %c0_i32 = arith.constant 0 : i32
    %c0_i32_0 = arith.constant 0 : i32
    return %arg0, %arg1, %c0_i32 : i32, i32, i32
  }
  func.func @transform_1(%arg0: i32, %arg1: i32) -> (i32, i32, i32) {
    %c0_i32 = arith.constant 0 : i32
    %c0_i32_0 = arith.constant 0 : i32
    %c0_i32_1 = arith.constant 0 : i32
    return %arg0, %c0_i32, %c0_i32_0 : i32, i32, i32
  }
  func.func @transform_2(%arg0: i32, %arg1: i32) -> (i32, i32, i32) {
    %c0_i32 = arith.constant 0 : i32
    %c0_i32_0 = arith.constant 0 : i32
    %c0_i32_1 = arith.constant 0 : i32
    return %arg0, %c0_i32, %c0_i32_0 : i32, i32, i32
  }
  func.func @transform_3(%arg0: i32, %arg1: i32) -> (i32, i32, i32) {
    %c0_i32 = arith.constant 0 : i32
    %c0_i32_0 = arith.constant 0 : i32
    return %arg0, %arg1, %c0_i32 : i32, i32, i32
  }
  func.func @transform_4(%arg0: i32, %arg1: i32) -> (i32, i32, i32, i32) {
    %c0_i32 = arith.constant 0 : i32
    %c0_i32_0 = arith.constant 0 : i32
    %c0_i32_1 = arith.constant 0 : i32
    return %arg0, %c0_i32, %arg1, %c0_i32_0 : i32, i32, i32, i32
  }
}

</mosaic_0001>

<llo_original>
// kernel: attention_layer_forward.5
$region0: #{attention_layer_forward.5}
  #allocation0 [shape = 'u32[]', space=smem, size = 0x4, offset = 0x4, fixed_abs, tag = 'smem constant byte address 0x4 - core index']
  #allocation1 [shape = 'u32[144,128]{1,0:T(1,128)}', space=vmem, size = 0x12000, scoped, tag = 'internal scratch']
  #allocation2 [shape = 'f32[16,32]{1,0:T(8,128)}', space=vmem, size = 0x2000, scoped, tag = 'scratch operand']
  %s0 = inlined_call_operand.vmem [shape: bf16[16,32], index: 0, kind: input, shape index: {}]
  %s1 = inlined_call_operand.vmem [shape: bf16[32,32], index: 1, kind: input, shape index: {}]
  %s2 = inlined_call_operand.vmem [shape: f32[1,32], index: 2, kind: input, shape index: {}]
  %s3 = inlined_call_operand.vmem [shape: bf16[16,32], index: 3, kind: output, shape index: {}]
  %s4 = sld [smem:[#allocation0]]
  $region30: #{attention_layer_forward.5} parent=0
    _
  %s6 = ssub.s32 1, %s4
  %s7 = scalar_select 0, %s6, %s4
  // Predicated region
  $region2: #{attention_layer_forward.5} parent=0 // pred_check
    _
  $region3: #{attention_layer_forward.5} parent=0 // pred_check_branch
    %9 = sbr.rel (0) target = $region5
  $region4: #{attention_layer_forward.5} parent=0 // pred_region
    _
  $region5: #{attention_layer_forward.5} parent=0 // pred_fallthru
    _
  // Predicated region
  $region6: #{attention_layer_forward.5} parent=0 // pred_check
    _
  $region7: #{attention_layer_forward.5} parent=0 // pred_check_branch
    %11 = sbr.rel (0) target = $region9
  $region8: #{attention_layer_forward.5} parent=0 // pred_region
    _
  $region9: #{attention_layer_forward.5} parent=0 // pred_fallthru
    _
  // Predicated region
  $region10: #{attention_layer_forward.5} parent=0 // pred_check
    _
  $region11: #{attention_layer_forward.5} parent=0 // pred_check_branch
    %13 = sbr.rel (0) target = $region13
  $region12: #{attention_layer_forward.5} parent=0 // pred_region
    _
  $region13: #{attention_layer_forward.5} parent=0 // pred_fallthru
    _
  %p15 = scmp.eq.s32.totalorder 0, 0
  // Predicated region
  $region14: #{attention_layer_forward.5} parent=0 // pred_check
    %p16 = pneg %p15
  $region15: #{attention_layer_forward.5} parent=0 // pred_check_branch
    %18 = sbr.rel (%p16) target = $region17
  $region16: #{attention_layer_forward.5} parent=0 // pred_region
    %vm19 = vcmask 261120
    %20 = vst.msk [vmem:[#allocation2] sm:$0xff] %vm19, 0.0
    %21 = vst.msk [vmem:[#allocation2 + $0x8] sm:$0xff] %vm19, 0.0
  $region17: #{attention_layer_forward.5} parent=0 // pred_fallthru
    _
  %v22 = vld [vmem:[#allocation2] sm:$0xff]
  %v23 = vld [vmem:[#allocation2 + $0x8] sm:$0xff]
  %v24 = vld [vmem:[%s0] sm:$0xf]
  %v25 = vld [vmem:[%s0 + $0x4] sm:$0xf]
  %v26 = vld [vmem:[%s1] sm:$0xf]
  %v27 = vld [vmem:[%s1 + $0x4] sm:$0xf]
  %v28 = vld [vmem:[%s1 + $0x8] sm:$0xf]
  %v29 = vld [vmem:[%s1 + $0xc] sm:$0xf]
  %v32 = vunpack.c.l.b16 %v24
  %v33 = vunpack.c.l.b16 %v25
  %v34 = vpack.c.b16 %v33, %v32
  %v39 = vunpack.c.l.b16 %v26
  %v40 = vunpack.c.l.b16 %v27
  %v41 = vunpack.c.l.b16 %v28
  %v42 = vunpack.c.l.b16 %v29
  %v43 = vpack.c.b16 %v40, %v39
  %v44 = vpack.c.b16 %v42, %v41
  %vm47 = vcmask 261120
  %v49 = vsel %vm47, %v34, 0
  %51 = vmatprep.subr.bf16.mxu0 0
  %52 = vmatpush1.bf16.msra.mxu0 %v43
  %53 = vmatprep.subr.bf16.mxu0 0
  %54 = vmatpush1.bf16.msra.mxu0 %v44
  %55 = vmatprep.subr.bf16.mxu0 0
  %56 = vmatpush1.bf16.msra.mxu0 0
  %57 = vmatprep.subr.bf16.mxu0 0
  %58 = vmatpush1.bf16.msra.mxu0 0
  %59 = vmatprep.subr.bf16.mxu0 0
  %60 = vmatpush1.bf16.msra.mxu0 0
  %61 = vmatprep.subr.bf16.mxu0 0
  %62 = vmatpush1.bf16.msra.mxu0 0
  %63 = vmatprep.subr.bf16.mxu0 0
  %64 = vmatpush1.bf16.msra.mxu0 0
  %65 = vmatprep.subr.bf16.mxu0 0
  %66 = vmatpush1.bf16.msra.mxu0 0
  %67 = vmatprep.subr.bf16.mxu0 0
  %68 = vmatpush1.bf16.msra.mxu0 0
  %69 = vmatprep.subr.bf16.mxu0 0
  %70 = vmatpush1.bf16.msra.mxu0 0
  %71 = vmatprep.subr.bf16.mxu0 0
  %72 = vmatpush1.bf16.msra.mxu0 0
  %73 = vmatprep.subr.bf16.mxu0 0
  %74 = vmatpush1.bf16.msra.mxu0 0
  %75 = vmatprep.subr.bf16.mxu0 0
  %76 = vmatpush1.bf16.msra.mxu0 0
  %77 = vmatprep.subr.bf16.mxu0 0
  %78 = vmatpush1.bf16.msra.mxu0 0
  %79 = vmatprep.subr.bf16.mxu0 0
  %80 = vmatpush1.bf16.msra.mxu0 0
  %81 = vmatprep.subr.bf16.mxu0 0
  %82 = vmatpush1.bf16.msra.mxu0 0
  %83 = vmatprep.mubr.bf16.mxu0 0
  %84 = vmatmul.mubr.bf16.gmra.mrb[0].mxu0 %v49
  %v85 = vpop.f32.mrb[0].mxu0
  %v86 = vadd.f32 0.0, %v85
  %v87 = vpop.f32.mrb[0].mxu0
  %v88 = vpop.f32.mrb[0].mxu0
  %v89 = vadd.f32 0.0, %v88
  %v90 = vpop.f32.mrb[0].mxu0
  %91 = vdwg.mxu0
  %v92 = vadd.f32 %v22, %v86
  %v93 = vadd.f32 %v23, %v89
  %94 = vst.msk [vmem:[#allocation2] sm:$0xff] %vm47, %v92
  %95 = vst.msk [vmem:[#allocation2 + $0x8] sm:$0xff] %vm47, %v93
  // Predicated region
  $region18: #{attention_layer_forward.5} parent=0 // pred_check
    %p96 = pneg %p15
  $region19: #{attention_layer_forward.5} parent=0 // pred_check_branch
    %98 = sbr.rel (%p96) target = $region21
  $region20: #{attention_layer_forward.5} parent=0 // pred_region
    %v99 = vld [vmem:[#allocation2] sm:$0xff]
    %v100 = vld [vmem:[#allocation2 + $0x8] sm:$0xff]
    %v101 = vld [vmem:[%s2] sm:$0x1]
    %v103 = vlaneseq
    %v104 = vshrl.u32 %v103, 7
    %v105 = vsub.s32 0, %v104
    %v106 = vrot.slane %v101, %v105
    %v108 = vadd.f32 %v99, %v106
    %v109 = vadd.f32 %v100, %v106
    %v110 = vpack.c.bf16 %v109, %v108
    %v112 = vunpack.c.l.b16 %v110
    %v113 = vunpack.c.h.b16 %v110
    %v114 = vpack.c.b16 %v112, %v112
    %v115 = vpack.c.b16 %v113, %v113
    %vm118 = vcmask 257024
    %119 = vst.msk [vmem:[%s3] sm:$0xf] %vm118, %v114
    %120 = vst.msk [vmem:[%s3 + $0x4] sm:$0xf] %vm118, %v115
  $region21: #{attention_layer_forward.5} parent=0 // pred_fallthru
    _
  // Predicated region
  $region22: #{attention_layer_forward.5} parent=0 // pred_check
    _
  $region23: #{attention_layer_forward.5} parent=0 // pred_check_branch
    %122 = sbr.rel (0) target = $region25
  $region24: #{attention_layer_forward.5} parent=0 // pred_region
    _
  $region25: #{attention_layer_forward.5} parent=0 // pred_fallthru
    _
  // Predicated region
  $region26: #{attention_layer_forward.5} parent=0 // pred_check
    _
  $region27: #{attention_layer_forward.5} parent=0 // pred_check_branch
    %124 = sbr.rel (0) target = $region29
  $region28: #{attention_layer_forward.5} parent=0 // pred_region
    _
  $region29: #{attention_layer_forward.5} parent=0 // pred_fallthru
    _

// kernel: attention_layer_forward.9
$region0: #{attention_layer_forward.9}
  #allocation0 [shape = 'u32[]', space=smem, size = 0x4, offset = 0x4, fixed_abs, tag = 'smem constant byte address 0x4 - core index']
  #allocation1 [shape = 'u32[144,128]{1,0:T(1,128)}', space=vmem, size = 0x12000, scoped, tag = 'internal scratch']
  #allocation2 [shape = 'f32[16,32]{1,0:T(8,128)}', space=vmem, size = 0x2000, scoped, tag = 'scratch operand']
  %s0 = inlined_call_operand.vmem [shape: bf16[16,32], index: 0, kind: input, shape index: {}]
  %s1 = inlined_call_operand.vmem [shape: bf16[32,32], index: 1, kind: input, shape index: {}]
  %s2 = inlined_call_operand.vmem [shape: f32[1,32], index: 2, kind: input, shape index: {}]
  %s3 = inlined_call_operand.hbm [shape: f32[16,32], index: 3, kind: output, shape index: {}]
  %s4 = sld [smem:[#allocation0]]
  $region30: #{attention_layer_forward.9} parent=0
    _
  %s6 = ssub.s32 1, %s4
  %s7 = scalar_select 0, %s6, %s4
  $region1: #{attention_layer_forward.9} parent=0
    #allocation3 [shape = 'u8[8192]{0}', space=vmem, size = 0x2000, scoped, tag = 'output window, operand 0, single buffered']
    #allocation4 [shape = 's32[1]{0}', space=sflag, size = 0x4, scoped, tag = 'scoped memory for attention_layer_forward.9']
    %8 = vsyncpa [#allocation4], 0
    // Predicated region
    $region2: #{attention_layer_forward.9} parent=1 // pred_check
      _
    $region3: #{attention_layer_forward.9} parent=1 // pred_check_branch
      %10 = sbr.rel (0) target = $region5
    $region4: #{attention_layer_forward.9} parent=1 // pred_region
      _
    $region5: #{attention_layer_forward.9} parent=1 // pred_fallthru
      _
    // Predicated region
    $region6: #{attention_layer_forward.9} parent=1 // pred_check
      _
    $region7: #{attention_layer_forward.9} parent=1 // pred_check_branch
      %12 = sbr.rel (0) target = $region9
    $region8: #{attention_layer_forward.9} parent=1 // pred_region
      _
    $region9: #{attention_layer_forward.9} parent=1 // pred_fallthru
      _
    // Predicated region
    $region10: #{attention_layer_forward.9} parent=1 // pred_check
      _
    $region11: #{attention_layer_forward.9} parent=1 // pred_check_branch
      %14 = sbr.rel (0) target = $region13
    $region12: #{attention_layer_forward.9} parent=1 // pred_region
      _
    $region13: #{attention_layer_forward.9} parent=1 // pred_fallthru
      _
    %p16 = scmp.eq.s32.totalorder 0, 0
    // Predicated region
    $region14: #{attention_layer_forward.9} parent=1 // pred_check
      %p17 = pneg %p16
    $region15: #{attention_layer_forward.9} parent=1 // pred_check_branch
      %19 = sbr.rel (%p17) target = $region17
    $region16: #{attention_layer_forward.9} parent=1 // pred_region
      %vm20 = vcmask 261120
      %21 = vst.msk [vmem:[#allocation2] sm:$0xff] %vm20, 0.0
      %22 = vst.msk [vmem:[#allocation2 + $0x8] sm:$0xff] %vm20, 0.0
    $region17: #{attention_layer_forward.9} parent=1 // pred_fallthru
      _
    %v23 = vld [vmem:[#allocation2] sm:$0xff]
    %v24 = vld [vmem:[#allocation2 + $0x8] sm:$0xff]
    %v25 = vld [vmem:[%s0] sm:$0xf]
    %v26 = vld [vmem:[%s0 + $0x4] sm:$0xf]
    %v27 = vld [vmem:[%s1] sm:$0xf]
    %v28 = vld [vmem:[%s1 + $0x4] sm:$0xf]
    %v29 = vld [vmem:[%s1 + $0x8] sm:$0xf]
    %v30 = vld [vmem:[%s1 + $0xc] sm:$0xf]
    %v33 = vunpack.c.l.b16 %v25
    %v34 = vunpack.c.l.b16 %v26
    %v35 = vpack.c.b16 %v34, %v33
    %v40 = vunpack.c.l.b16 %v27
    %v41 = vunpack.c.l.b16 %v28
    %v42 = vunpack.c.l.b16 %v29
    %v43 = vunpack.c.l.b16 %v30
    %v44 = vpack.c.b16 %v41, %v40
    %v45 = vpack.c.b16 %v43, %v42
    %vm48 = vcmask 261120
    %v50 = vsel %vm48, %v35, 0
    %52 = vmatprep.subr.bf16.mxu0 0
    %53 = vmatpush1.bf16.msra.mxu0 %v44
    %54 = vmatprep.subr.bf16.mxu0 0
    %55 = vmatpush1.bf16.msra.mxu0 %v45
    %56 = vmatprep.subr.bf16.mxu0 0
    %57 = vmatpush1.bf16.msra.mxu0 0
    %58 = vmatprep.subr.bf16.mxu0 0
    %59 = vmatpush1.bf16.msra.mxu0 0
    %60 = vmatprep.subr.bf16.mxu0 0
    %61 = vmatpush1.bf16.msra.mxu0 0
    %62 = vmatprep.subr.bf16.mxu0 0
    %63 = vmatpush1.bf16.msra.mxu0 0
    %64 = vmatprep.subr.bf16.mxu0 0
    %65 = vmatpush1.bf16.msra.mxu0 0
    %66 = vmatprep.subr.bf16.mxu0 0
    %67 = vmatpush1.bf16.msra.mxu0 0
    %68 = vmatprep.subr.bf16.mxu0 0
    %69 = vmatpush1.bf16.msra.mxu0 0
    %70 = vmatprep.subr.bf16.mxu0 0
    %71 = vmatpush1.bf16.msra.mxu0 0
    %72 = vmatprep.subr.bf16.mxu0 0
    %73 = vmatpush1.bf16.msra.mxu0 0
    %74 = vmatprep.subr.bf16.mxu0 0
    %75 = vmatpush1.bf16.msra.mxu0 0
    %76 = vmatprep.subr.bf16.mxu0 0
    %77 = vmatpush1.bf16.msra.mxu0 0
    %78 = vmatprep.subr.bf16.mxu0 0
    %79 = vmatpush1.bf16.msra.mxu0 0
    %80 = vmatprep.subr.bf16.mxu0 0
    %81 = vmatpush1.bf16.msra.mxu0 0
    %82 = vmatprep.subr.bf16.mxu0 0
    %83 = vmatpush1.bf16.msra.mxu0 0
    %84 = vmatprep.mubr.bf16.mxu0 0
    %85 = vmatmul.mubr.bf16.gmra.mrb[0].mxu0 %v50
    %v86 = vpop.f32.mrb[0].mxu0
    %v87 = vadd.f32 0.0, %v86
    %v88 = vpop.f32.mrb[0].mxu0
    %v89 = vpop.f32.mrb[0].mxu0
    %v90 = vadd.f32 0.0, %v89
    %v91 = vpop.f32.mrb[0].mxu0
    %92 = vdwg.mxu0
    %v93 = vadd.f32 %v23, %v87
    %v94 = vadd.f32 %v24, %v90
    %95 = vst.msk [vmem:[#allocation2] sm:$0xff] %vm48, %v93
    %96 = vst.msk [vmem:[#allocation2 + $0x8] sm:$0xff] %vm48, %v94
    // Predicated region
    $region18: #{attention_layer_forward.9} parent=1 // pred_check
      %p97 = pneg %p16
    $region19: #{attention_layer_forward.9} parent=1 // pred_check_branch
      %99 = sbr.rel (%p97) target = $region21
    $region20: #{attention_layer_forward.9} parent=1 // pred_region
      %v100 = vld [vmem:[#allocation2] sm:$0xff]
      %v101 = vld [vmem:[#allocation2 + $0x8] sm:$0xff]
      %v102 = vld [vmem:[%s2] sm:$0x1]
      %v104 = vlaneseq
      %v105 = vshrl.u32 %v104, 7
      %v106 = vsub.s32 0, %v105
      %v107 = vrot.slane %v102, %v106
      %v109 = vadd.f32 %v100, %v107
      %v110 = vadd.f32 %v101, %v107
      %111 = vst.msk [vmem:[#allocation3] sm:$0xff] %vm48, %v109
      %112 = vst.msk [vmem:[#allocation3 + $0x8] sm:$0xff] %vm48, %v110
    $region21: #{attention_layer_forward.9} parent=1 // pred_fallthru
      _
    // Predicated region
    $region22: #{attention_layer_forward.9} parent=1 // pred_check
      _
    $region23: #{attention_layer_forward.9} parent=1 // pred_check_branch
      %114 = sbr.rel (0) target = $region25
    $region24: #{attention_layer_forward.9} parent=1 // pred_region
      %s116 = ssub.s32 256, 256
      %117 = vsyncadd [#allocation4], %s116
      %s118 = sshll.u32 [#allocation3], 4
      %s119 = int_to_ptr.vmem [resolvable:$true] %s118
      %124 = dma.vmem_to_hbm [thread:$0]  %s119, 256, %s3, [#allocation4], 128, 128, 8
    $region25: #{attention_layer_forward.9} parent=1 // pred_fallthru
      _
    // Predicated region
    $region26: #{attention_layer_forward.9} parent=1 // pred_check
      _
    $region27: #{attention_layer_forward.9} parent=1 // pred_check_branch
      %126 = sbr.rel (0) target = $region29
    $region28: #{attention_layer_forward.9} parent=1 // pred_region
      %127 = dma.done [#allocation4], 256
    $region29: #{attention_layer_forward.9} parent=1 // pred_fallthru
      _
    %128 = vsyncpa [#allocation4], 1

// kernel: attention_layer_forward.8
$region0: #{attention_layer_forward.8}
  #allocation0 [shape = 'u32[]', space=smem, size = 0x4, offset = 0x4, fixed_abs, tag = 'smem constant byte address 0x4 - core index']
  #allocation1 [shape = 'u32[144,128]{1,0:T(1,128)}', space=vmem, size = 0x12000, scoped, tag = 'internal scratch']
  %s0 = inlined_call_operand.vmem [shape: bf16[2,8,32], index: 0, kind: input, shape index: {}]
  %s1 = inlined_call_operand.vmem [shape: bf16[2,8,32], index: 1, kind: input, shape index: {}]
  %s2 = inlined_call_operand.vmem [shape: bf16[2,8,32], index: 2, kind: input, shape index: {}]
  %s3 = inlined_call_operand.vmem [shape: bf16[2,8,32], index: 3, kind: output, shape index: {0}]
  %s4 = inlined_call_operand.hbm [shape: bf16[2,4,8,8], index: 4, kind: output, shape index: {1}]
  %5 = xla_tuple %s3, %s4
  %s6 = sld [smem:[#allocation0]]
  $region53: #{attention_layer_forward.8} parent=0
    _
  %s8 = ssub.s32 1, %s6
  %s9 = scalar_select 0, %s8, %s6
  $region1: #{attention_layer_forward.8} parent=0
    #allocation2 [shape = 'u8[16384]{0}', space=vmem, size = 0x4000, scoped, tag = 'output window, operand 1']
    #allocation3 [shape = 's32[2]{0}', space=sflag, size = 0x8, scoped, tag = 'scoped memory for attention_layer_forward.8']
    %10 = vsyncpa [#allocation3], 0
    %s11 = scalar_lea.sflag [#allocation3], 1
    %12 = vsyncpa %s11, 0
    loop: start=0, step=1, limit=4
    $region2: #{attention_layer_forward.8} parent=1 // loop_pre_header
      _
    $region3: #{attention_layer_forward.8} parent=1 // loop_header
      %s14 = sphi 0, %s18
      %p15 = scmp.ge.s32.totalorder %s14, 4
      %s21 = sphi 0, %s33
      %s22 = sphi 0, %s29
      %s23 = sphi 0, %s21
      %s24 = sphi 0, %s22
      %s25 = sphi 0, %s23
      %s26 = sphi 0, %s24
      %s38 = sphi 0, %s40
      %s41 = sphi 0, %s38
      %s42 = sphi 0, %s41
      %s58 = sphi 0, %s42
      %s64 = sphi 0, %s66
      %s67 = sphi 0, %s64
      %s68 = sphi 0, %s67
      %s84 = sphi 0, %s68
      %s90 = sphi 0, %s92
      %s93 = sphi 0, %s90
      %s94 = sphi 0, %s93
      %s110 = sphi 0, %s94
      %s118 = sphi 0, %s120
      %s121 = sphi 0, %s118
      %s122 = sphi 0, %s121
      %s138 = sphi 0, %s122
      %s146 = sphi 0, %s148
      %s149 = sphi 0, %s146
      %s150 = sphi 0, %s149
      %s166 = sphi 0, %s150
    $region4: #{attention_layer_forward.8} parent=1 // loop_header_branch
      %17 = sbr.rel (%p15) target = $region8
    $region5: #{attention_layer_forward.8} parent=1 // loop_body
      %s19 = ssub.s32 %s14, 1
      %s20 = ssub.s32 %s14, 2
      %s27 = sadd.s32 1, %s22
      %p28 = scmp.ge.s32.totalorder %s27, 1
      %s29 = scalar_select %p28, 0, %s27
      %s30 = sadd.s32 1, %s21
      %s31 = scalar_select %p28, %s30, %s21
      %p32 = scmp.ge.s32.totalorder %s31, 2
      %s33 = scalar_select %p32, 0, %s31
      %s34 = ssub.s32 %s21, %s33
      %s35 = ssub.s32 %s22, %s29
      %s36 = sor.u32 %s34, %s35
      %p37 = scmp.eq.s32.totalorder %s36, 0
      %s39 = sadd.s32 %s38, 1
      %s40 = scalar_select %p37, %s38, %s39
      %p43 = pneg %p37
      %p44 = scmp.eq.s32.totalorder %s14, 1
      %p45 = por %p43, %p44
      %p46 = scmp.ne.s32.totalorder %s38, %s41
      %p47 = scmp.eq.s32.totalorder %s14, 0
      %p48 = por %p46, %p47
      %p49 = scmp.ne.s32.totalorder %s38, %s41
      %p50 = scmp.eq.s32.totalorder %s19, 1
      %p51 = por %p49, %p50
      %p52 = scmp.ne.s32.totalorder %s41, %s42
      %p53 = scmp.eq.s32.totalorder %s19, 0
      %p54 = por %p52, %p53
      %p55 = scmp.ne.s32.totalorder %s41, %s42
      %p56 = scmp.eq.s32.totalorder %s20, 1
      %p57 = por %p55, %p56
      %p59 = scmp.ne.s32.totalorder %s42, %s58
      %p60 = scmp.eq.s32.totalorder %s20, 0
      %p61 = por %p59, %p60
      %s62 = ssub.s32 %s21, %s33
      %p63 = scmp.eq.s32.totalorder %s62, 0
      %s65 = sadd.s32 %s64, 1
      %s66 = scalar_select %p63, %s64, %s65
      %p69 = pneg %p63
      %p70 = scmp.eq.s32.totalorder %s14, 1
      %p71 = por %p69, %p70
      %p72 = scmp.ne.s32.totalorder %s64, %s67
      %p73 = scmp.eq.s32.totalorder %s14, 0
      %p74 = por %p72, %p73
      %p75 = scmp.ne.s32.totalorder %s64, %s67
      %p76 = scmp.eq.s32.totalorder %s19, 1
      %p77 = por %p75, %p76
      %p78 = scmp.ne.s32.totalorder %s67, %s68
      %p79 = scmp.eq.s32.totalorder %s19, 0
      %p80 = por %p78, %p79
      %p81 = scmp.ne.s32.totalorder %s67, %s68
      %p82 = scmp.eq.s32.totalorder %s20, 1
      %p83 = por %p81, %p82
      %p85 = scmp.ne.s32.totalorder %s68, %s84
      %p86 = scmp.eq.s32.totalorder %s20, 0
      %p87 = por %p85, %p86
      %s88 = ssub.s32 %s21, %s33
      %p89 = scmp.eq.s32.totalorder %s88, 0
      %s91 = sadd.s32 %s90, 1
      %s92 = scalar_select %p89, %s90, %s91
      %p95 = pneg %p89
      %p96 = scmp.eq.s32.totalorder %s14, 1
      %p97 = por %p95, %p96
      %p98 = scmp.ne.s32.totalorder %s90, %s93
      %p99 = scmp.eq.s32.totalorder %s14, 0
      %p100 = por %p98, %p99
      %p101 = scmp.ne.s32.totalorder %s90, %s93
      %p102 = scmp.eq.s32.totalorder %s19, 1
      %p103 = por %p101, %p102
      %p104 = scmp.ne.s32.totalorder %s93, %s94
      %p105 = scmp.eq.s32.totalorder %s19, 0
      %p106 = por %p104, %p105
      %p107 = scmp.ne.s32.totalorder %s93, %s94
      %p108 = scmp.eq.s32.totalorder %s20, 1
      %p109 = por %p107, %p108
      %p111 = scmp.ne.s32.totalorder %s94, %s110
      %p112 = scmp.eq.s32.totalorder %s20, 0
      %p113 = por %p111, %p112
      %s114 = ssub.s32 %s21, %s33
      %s115 = ssub.s32 %s22, %s29
      %s116 = sor.u32 %s114, %s115
      %p117 = scmp.eq.s32.totalorder %s116, 0
      %s119 = sadd.s32 %s118, 1
      %s120 = scalar_select %p117, %s118, %s119
      %p123 = pneg %p117
      %p124 = scmp.eq.s32.totalorder %s14, 1
      %p125 = por %p123, %p124
      %p126 = scmp.ne.s32.totalorder %s118, %s121
      %p127 = scmp.eq.s32.totalorder %s14, 0
      %p128 = por %p126, %p127
      %p129 = scmp.ne.s32.totalorder %s118, %s121
      %p130 = scmp.eq.s32.totalorder %s19, 1
      %p131 = por %p129, %p130
      %p132 = scmp.ne.s32.totalorder %s121, %s122
      %p133 = scmp.eq.s32.totalorder %s19, 0
      %p134 = por %p132, %p133
      %p135 = scmp.ne.s32.totalorder %s121, %s122
      %p136 = scmp.eq.s32.totalorder %s20, 1
      %p137 = por %p135, %p136
      %p139 = scmp.ne.s32.totalorder %s122, %s138
      %p140 = scmp.eq.s32.totalorder %s20, 0
      %p141 = por %p139, %p140
      %s142 = ssub.s32 %s21, %s33
      %s143 = ssub.s32 %s22, %s29
      %s144 = sor.u32 %s142, %s143
      %p145 = scmp.eq.s32.totalorder %s144, 0
      %s147 = sadd.s32 %s146, 1
      %s148 = scalar_select %p145, %s146, %s147
      %p151 = pneg %p145
      %p152 = scmp.eq.s32.totalorder %s14, 1
      %p153 = por %p151, %p152
      %p154 = scmp.ne.s32.totalorder %s146, %s149
      %p155 = scmp.eq.s32.totalorder %s14, 0
      %p156 = por %p154, %p155
      %p157 = scmp.ne.s32.totalorder %s146, %s149
      %p158 = scmp.eq.s32.totalorder %s19, 1
      %p159 = por %p157, %p158
      %p160 = scmp.ne.s32.totalorder %s149, %s150
      %p161 = scmp.eq.s32.totalorder %s19, 0
      %p162 = por %p160, %p161
      %p163 = scmp.ne.s32.totalorder %s149, %s150
      %p164 = scmp.eq.s32.totalorder %s20, 1
      %p165 = por %p163, %p164
      %p167 = scmp.ne.s32.totalorder %s150, %s166
      %p168 = scmp.eq.s32.totalorder %s20, 0
      %p169 = por %p167, %p168
      %p170 = scmp.le.s32.totalorder 1, %s14
      %p171 = scmp.lt.s32.totalorder %s14, 3
      %p172 = pnand %p170, %p171
      %p173 = pneg %p172
      // Predicated region
      $region9: #{attention_layer_forward.8} parent=5 // pred_check
        _
      $region10: #{attention_layer_forward.8} parent=5 // pred_check_branch
        %175 = sbr.rel (%p172) target = $region12
      $region11: #{attention_layer_forward.8} parent=5 // pred_region
        %s176 = ssub.s32 %s14, 1
        // Predicated region
        $region13: #{attention_layer_forward.8} parent=11 // pred_check
          %p177 = pneg %p80
        $region14: #{attention_layer_forward.8} parent=11 // pred_check_branch
          %179 = sbr.rel (%p177) target = $region16
        $region15: #{attention_layer_forward.8} parent=11 // pred_region
          %p180 = scmp.lt.s32.totalorder %s23, 1
          %s181 = scalar_select %p180, %s23, 1
          %s182 = smul.addr %s181, 4
          %s183 = scalar_lea.vmem %s1, %s182
        $region16: #{attention_layer_forward.8} parent=11 // pred_fallthru
          _
        // Predicated region
        $region17: #{attention_layer_forward.8} parent=11 // pred_check
          %p184 = pneg %p106
        $region18: #{attention_layer_forward.8} parent=11 // pred_check_branch
          %186 = sbr.rel (%p184) target = $region20
        $region19: #{attention_layer_forward.8} parent=11 // pred_region
          %p187 = scmp.lt.s32.totalorder %s23, 1
          %s188 = scalar_select %p187, %s23, 1
          %s189 = smul.addr %s188, 4
          %s190 = scalar_lea.vmem %s2, %s189
        $region20: #{attention_layer_forward.8} parent=11 // pred_fallthru
          _
      $region12: #{attention_layer_forward.8} parent=5 // pred_fallthru
        _
      %p191 = scmp.lt.s32.totalorder %s14, 2
      // Predicated region
      $region21: #{attention_layer_forward.8} parent=5 // pred_check
        %p192 = pneg %p191
      $region22: #{attention_layer_forward.8} parent=5 // pred_check_branch
        %194 = sbr.rel (%p192) target = $region24
      $region23: #{attention_layer_forward.8} parent=5 // pred_region
        // Predicated region
        $region25: #{attention_layer_forward.8} parent=23 // pred_check
          %p195 = pneg %p48
        $region26: #{attention_layer_forward.8} parent=23 // pred_check_branch
          %197 = sbr.rel (%p195) target = $region28
        $region27: #{attention_layer_forward.8} parent=23 // pred_region
          %p198 = scmp.lt.s32.totalorder %s21, 1
          %s199 = scalar_select %p198, %s21, 1
          %p200 = scmp.lt.s32.totalorder %s22, 0
          %s201 = scalar_select %p200, %s22, 0
          %s202 = sadd.s32 %s201, %s199
          %s203 = smul.addr %s202, 4
          %s204 = scalar_lea.vmem %s0, %s203
        $region28: #{attention_layer_forward.8} parent=23 // pred_fallthru
          _
      $region24: #{attention_layer_forward.8} parent=5 // pred_fallthru
        _
      %p205 = scmp.le.s32.totalorder 1, %s14
      %p206 = scmp.lt.s32.totalorder %s14, 3
      %p207 = pnand %p205, %p206
      %p208 = pneg %p207
      // Predicated region
      $region29: #{attention_layer_forward.8} parent=5 // pred_check
        _
      $region30: #{attention_layer_forward.8} parent=5 // pred_check_branch
        %210 = sbr.rel (%p207) target = $region32
      $region31: #{attention_layer_forward.8} parent=5 // pred_region
        %s211 = ssub.s32 %s14, 1
        %p212 = scmp.lt.s32.totalorder %s23, 1
        %s213 = scalar_select %p212, %s23, 1
        %p214 = scmp.lt.s32.totalorder %s24, 0
        %s215 = scalar_select %p214, %s24, 0
        %s216 = sadd.s32 %s215, %s213
        %s217 = smul.addr %s216, 4
        %s218 = scalar_lea.vmem %s0, %s217
        %p219 = pneg %p54
        %p220 = pneg %p51
        %p221 = scmp.lt.s32.totalorder %s23, 1
        %s222 = scalar_select %p221, %s23, 1
        %s223 = smul.addr %s222, 4
        %s224 = scalar_lea.vmem %s1, %s223
        %p225 = pneg %p80
        %p226 = pneg %p77
        %p227 = scmp.lt.s32.totalorder %s23, 1
        %s228 = scalar_select %p227, %s23, 1
        %s229 = smul.addr %s228, 4
        %s230 = scalar_lea.vmem %s2, %s229
        %p231 = pneg %p106
        %p232 = pneg %p103
        %p233 = pneg %p134
        %p234 = pneg %p131
        %p235 = scmp.lt.s32.totalorder %s23, 1
        %s236 = scalar_select %p235, %s23, 1
        %p237 = scmp.lt.s32.totalorder %s24, 0
        %s238 = scalar_select %p237, %s24, 0
        %s239 = sadd.s32 %s238, %s236
        %s240 = smul.addr %s239, 4
        %s241 = scalar_lea.vmem %s3, %s240
        %p242 = pneg %p162
        %p243 = pneg %p159
        %s244 = sand.u32 %s149, 1
        %s245 = scalar_lea.sflag [#allocation3], %s244
        %s246 = sand.u32 %s149, 1
        %s247 = smul.addr %s246, 16
        %s248 = scalar_lea.vmem [#allocation2], %s247
        %p249 = scmp.lt.s32.totalorder %s23, 1
        %s250 = scalar_select %p249, %s23, 1
        %p251 = scmp.lt.s32.totalorder %s24, 0
        %s252 = scalar_select %p251, %s24, 0
        %s253 = sadd.s32 %s252, %s250
        %s254 = smul.addr %s253, 4
        %s255 = scalar_lea.vmem %s0, %s254
        %p256 = scmp.lt.s32.totalorder %s23, 1
        %s257 = scalar_select %p256, %s23, 1
        %s258 = smul.addr %s257, 4
        %s259 = scalar_lea.vmem %s1, %s258
        %p260 = scmp.lt.s32.totalorder %s23, 1
        %s261 = scalar_select %p260, %s23, 1
        %s262 = smul.addr %s261, 4
        %s263 = scalar_lea.vmem %s2, %s262
        %p264 = scmp.lt.s32.totalorder %s23, 1
        %s265 = scalar_select %p264, %s23, 1
        %p266 = scmp.lt.s32.totalorder %s24, 0
        %s267 = scalar_select %p266, %s24, 0
        %s268 = sadd.s32 %s267, %s265
        %s269 = smul.addr %s268, 4
        %s270 = scalar_lea.vmem %s3, %s269
        %v272 = vld [vmem:[%s255] sm:$0xf]
        %v273 = vld [vmem:[%s259] sm:$0xf]
        %v274 = vld [vmem:[%s263] sm:$0xf]
        %vm275 = vcmask 64512
        %v277 = vsel %vm275, %v272, 0
        %v280 = vsel %vm275, %v273, 0
        %282 = vmatprep.subr.bf16.mxu0 0
        %283 = vmatpush1.bf16.xpose.msra.mxu0 %v280
        %284 = vmatprep.subr.bf16.mxu0 0
        %285 = vmatpush1.bf16.xpose.msra.mxu0 0
        %286 = vmatprep.subr.bf16.mxu0 0
        %287 = vmatpush1.bf16.xpose.msra.mxu0 0
        %288 = vmatprep.subr.bf16.mxu0 0
        %289 = vmatpush1.bf16.xpose.msra.mxu0 0
        %290 = vmatprep.subr.bf16.mxu0 0
        %291 = vmatpush1.bf16.xpose.msra.mxu0 0
        %292 = vmatprep.subr.bf16.mxu0 0
        %293 = vmatpush1.bf16.xpose.msra.mxu0 0
        %294 = vmatprep.subr.bf16.mxu0 0
        %295 = vmatpush1.bf16.xpose.msra.mxu0 0
        %296 = vmatprep.subr.bf16.mxu0 0
        %297 = vmatpush1.bf16.xpose.msra.mxu0 0
        %298 = vmatprep.subr.bf16.mxu0 0
        %299 = vmatpush1.bf16.xpose.msra.mxu0 0
        %300 = vmatprep.subr.bf16.mxu0 0
        %301 = vmatpush1.bf16.xpose.msra.mxu0 0
        %302 = vmatprep.subr.bf16.mxu0 0
        %303 = vmatpush1.bf16.xpose.msra.mxu0 0
        %304 = vmatprep.subr.bf16.mxu0 0
        %305 = vmatpush1.bf16.xpose.msra.mxu0 0
        %306 = vmatprep.subr.bf16.mxu0 0
        %307 = vmatpush1.bf16.xpose.msra.mxu0 0
        %308 = vmatprep.subr.bf16.mxu0 0
        %309 = vmatpush1.bf16.xpose.msra.mxu0 0
        %310 = vmatprep.subr.bf16.mxu0 0
        %311 = vmatpush1.bf16.xpose.msra.mxu0 0
        %312 = vmatprep.subr.bf16.mxu0 0
        %313 = vmatpush1.bf16.xpose.msra.mxu0 0
        %314 = vmatprep.mubr.bf16.mxu0 0
        %315 = vmatmul.mubr.bf16.gmra.mrb[0].mxu0 %v277
        %v316 = vpop.f32.mrb[0].mxu0
        %v317 = vadd.f32 0.0, %v316
        %v318 = vpop.f32.mrb[0].mxu0
        %v319 = vpop.f32.mrb[0].mxu0
        %v320 = vpop.f32.mrb[0].mxu0
        %321 = vdwg.mxu0
        %v322 = vsel %vm275, %v317, -inf
        %323 = vmax.xlane.f32.xlu0 %v322
        %v324 = vpop.xlane.xlu0 %323
        %v325 = vsub.f32 %v317, %v324
        %v326 = vmul.f32 %v325, 1.442695
        %v327 = vpow.pop %v326
        %v328 = vsel %vm275, %v327, 0.0
        %329 = vadd.xlane.f32.xlu0 %v328
        %v330 = vpop.xlane.xlu0 %329
        %v331 = vrcp.pop %v330
        %v332 = vmul.f32 %v327, %v331
        %v333 = vpack.c.bf16 %v332, %v332
        %vm334 = vcmask 60416
        %335 = vst.msk [vmem:[%s248] sm:$0xf] %vm334, %v333
        %v337 = vsel %vm275, %v333, 0
        %vm339 = vcmask 1043456
        %v341 = vsel %vm339, %v274, 0
        %343 = vmatprep.subr.bf16.mxu0 0
        %344 = vmatpush1.bf16.msra.mxu0 %v341
        %345 = vmatprep.subr.bf16.mxu0 0
        %346 = vmatpush1.bf16.msra.mxu0 0
        %347 = vmatprep.subr.bf16.mxu0 0
        %348 = vmatpush1.bf16.msra.mxu0 0
        %349 = vmatprep.subr.bf16.mxu0 0
        %350 = vmatpush1.bf16.msra.mxu0 0
        %351 = vmatprep.subr.bf16.mxu0 0
        %352 = vmatpush1.bf16.msra.mxu0 0
        %353 = vmatprep.subr.bf16.mxu0 0
        %354 = vmatpush1.bf16.msra.mxu0 0
        %355 = vmatprep.subr.bf16.mxu0 0
        %356 = vmatpush1.bf16.msra.mxu0 0
        %357 = vmatprep.subr.bf16.mxu0 0
        %358 = vmatpush1.bf16.msra.mxu0 0
        %359 = vmatprep.subr.bf16.mxu0 0
        %360 = vmatpush1.bf16.msra.mxu0 0
        %361 = vmatprep.subr.bf16.mxu0 0
        %362 = vmatpush1.bf16.msra.mxu0 0
        %363 = vmatprep.subr.bf16.mxu0 0
        %364 = vmatpush1.bf16.msra.mxu0 0
        %365 = vmatprep.subr.bf16.mxu0 0
        %366 = vmatpush1.bf16.msra.mxu0 0
        %367 = vmatprep.subr.bf16.mxu0 0
        %368 = vmatpush1.bf16.msra.mxu0 0
        %369 = vmatprep.subr.bf16.mxu0 0
        %370 = vmatpush1.bf16.msra.mxu0 0
        %371 = vmatprep.subr.bf16.mxu0 0
        %372 = vmatpush1.bf16.msra.mxu0 0
        %373 = vmatprep.subr.bf16.mxu0 0
        %374 = vmatpush1.bf16.msra.mxu0 0
        %375 = vmatprep.mubr.bf16.mxu0 0
        %376 = vmatmul.mubr.bf16.gmra.mrb[0].mxu0 %v337
        %v377 = vpop.f32.mrb[0].mxu0
        %v378 = vadd.f32 0.0, %v377
        %v379 = vpop.f32.mrb[0].mxu0
        %v380 = vpop.f32.mrb[0].mxu0
        %v381 = vpop.f32.mrb[0].mxu0
        %382 = vdwg.mxu0
        %v384 = vunpack.c.l.b16 %v272
        %v385 = vpack.c.b16 %v384, %v384
        %386 = vrot.lane.b32.xlu0 %v385, 120
        %v387 = vpop.permute.xlu0 %386
        %v389 = vunpack.c.l.b16 %v273
        %v390 = vpack.c.b16 %v389, %v389
        %391 = vrot.lane.b32.xlu0 %v390, 120
        %v392 = vpop.permute.xlu0 %391
        %v394 = vsel %vm275, %v387, 0
        %v397 = vsel %vm275, %v392, 0
        %399 = vmatprep.subr.bf16.mxu0 0
        %400 = vmatpush1.bf16.xpose.msra.mxu0 %v397
        %401 = vmatprep.subr.bf16.mxu0 0
        %402 = vmatpush1.bf16.xpose.msra.mxu0 0
        %403 = vmatprep.subr.bf16.mxu0 0
        %404 = vmatpush1.bf16.xpose.msra.mxu0 0
        %405 = vmatprep.subr.bf16.mxu0 0
        %406 = vmatpush1.bf16.xpose.msra.mxu0 0
        %407 = vmatprep.subr.bf16.mxu0 0
        %408 = vmatpush1.bf16.xpose.msra.mxu0 0
        %409 = vmatprep.subr.bf16.mxu0 0
        %410 = vmatpush1.bf16.xpose.msra.mxu0 0
        %411 = vmatprep.subr.bf16.mxu0 0
        %412 = vmatpush1.bf16.xpose.msra.mxu0 0
        %413 = vmatprep.subr.bf16.mxu0 0
        %414 = vmatpush1.bf16.xpose.msra.mxu0 0
        %415 = vmatprep.subr.bf16.mxu0 0
        %416 = vmatpush1.bf16.xpose.msra.mxu0 0
        %417 = vmatprep.subr.bf16.mxu0 0
        %418 = vmatpush1.bf16.xpose.msra.mxu0 0
        %419 = vmatprep.subr.bf16.mxu0 0
        %420 = vmatpush1.bf16.xpose.msra.mxu0 0
        %421 = vmatprep.subr.bf16.mxu0 0
        %422 = vmatpush1.bf16.xpose.msra.mxu0 0
        %423 = vmatprep.subr.bf16.mxu0 0
        %424 = vmatpush1.bf16.xpose.msra.mxu0 0
        %425 = vmatprep.subr.bf16.mxu0 0
        %426 = vmatpush1.bf16.xpose.msra.mxu0 0
        %427 = vmatprep.subr.bf16.mxu0 0
        %428 = vmatpush1.bf16.xpose.msra.mxu0 0
        %429 = vmatprep.subr.bf16.mxu0 0
        %430 = vmatpush1.bf16.xpose.msra.mxu0 0
        %431 = vmatprep.mubr.bf16.mxu0 0
        %432 = vmatmul.mubr.bf16.gmra.mrb[0].mxu0 %v394
        %v433 = vpop.f32.mrb[0].mxu0
        %v434 = vadd.f32 0.0, %v433
        %v435 = vpop.f32.mrb[0].mxu0
        %v436 = vpop.f32.mrb[0].mxu0
        %v437 = vpop.f32.mrb[0].mxu0
        %438 = vdwg.mxu0
        %v439 = vsel %vm275, %v434, -inf
        %440 = vmax.xlane.f32.xlu0 %v439
        %v441 = vpop.xlane.xlu0 %440
        %v442 = vsub.f32 %v434, %v441
        %v443 = vmul.f32 %v442, 1.442695
        %v444 = vpow.pop %v443
        %v445 = vsel %vm275, %v444, 0.0
        %446 = vadd.xlane.f32.xlu0 %v445
        %v447 = vpop.xlane.xlu0 %446
        %v448 = vrcp.pop %v447
        %v449 = vmul.f32 %v444, %v448
        %v450 = vpack.c.bf16 %v449, %v449
        %s451 = scalar_lea.vmem %s248, 4 [#allocation2]
        %452 = vst.msk [vmem:[%s451] sm:$0xf] %vm334, %v450
        %v454 = vunpack.c.l.b16 %v274
        %v455 = vpack.c.b16 %v454, %v454
        %456 = vrot.lane.b32.xlu0 %v455, 120
        %v457 = vpop.permute.xlu0 %456
        %v459 = vsel %vm275, %v450, 0
        %v462 = vsel %vm339, %v457, 0
        %464 = vmatprep.subr.bf16.mxu0 0
        %465 = vmatpush1.bf16.msra.mxu0 %v462
        %466 = vmatprep.subr.bf16.mxu0 0
        %467 = vmatpush1.bf16.msra.mxu0 0
        %468 = vmatprep.subr.bf16.mxu0 0
        %469 = vmatpush1.bf16.msra.mxu0 0
        %470 = vmatprep.subr.bf16.mxu0 0
        %471 = vmatpush1.bf16.msra.mxu0 0
        %472 = vmatprep.subr.bf16.mxu0 0
        %473 = vmatpush1.bf16.msra.mxu0 0
        %474 = vmatprep.subr.bf16.mxu0 0
        %475 = vmatpush1.bf16.msra.mxu0 0
        %476 = vmatprep.subr.bf16.mxu0 0
        %477 = vmatpush1.bf16.msra.mxu0 0
        %478 = vmatprep.subr.bf16.mxu0 0
        %479 = vmatpush1.bf16.msra.mxu0 0
        %480 = vmatprep.subr.bf16.mxu0 0
        %481 = vmatpush1.bf16.msra.mxu0 0
        %482 = vmatprep.subr.bf16.mxu0 0
        %483 = vmatpush1.bf16.msra.mxu0 0
        %484 = vmatprep.subr.bf16.mxu0 0
        %485 = vmatpush1.bf16.msra.mxu0 0
        %486 = vmatprep.subr.bf16.mxu0 0
        %487 = vmatpush1.bf16.msra.mxu0 0
        %488 = vmatprep.subr.bf16.mxu0 0
        %489 = vmatpush1.bf16.msra.mxu0 0
        %490 = vmatprep.subr.bf16.mxu0 0
        %491 = vmatpush1.bf16.msra.mxu0 0
        %492 = vmatprep.subr.bf16.mxu0 0
        %493 = vmatpush1.bf16.msra.mxu0 0
        %494 = vmatprep.subr.bf16.mxu0 0
        %495 = vmatpush1.bf16.msra.mxu0 0
        %496 = vmatprep.mubr.bf16.mxu0 0
        %497 = vmatmul.mubr.bf16.gmra.mrb[0].mxu0 %v459
        %v498 = vpop.f32.mrb[0].mxu0
        %v499 = vadd.f32 0.0, %v498
        %v500 = vpop.f32.mrb[0].mxu0
        %v501 = vpop.f32.mrb[0].mxu0
        %v502 = vpop.f32.mrb[0].mxu0
        %503 = vdwg.mxu0
        %504 = vrot.lane.b32.xlu0 %v385, 112
        %v505 = vpop.permute.xlu0 %504
        %506 = vrot.lane.b32.xlu0 %v390, 112
        %v507 = vpop.permute.xlu0 %506
        %v509 = vsel %vm275, %v505, 0
        %v512 = vsel %vm275, %v507, 0
        %514 = vmatprep.subr.bf16.mxu0 0
        %515 = vmatpush1.bf16.xpose.msra.mxu0 %v512
        %516 = vmatprep.subr.bf16.mxu0 0
        %517 = vmatpush1.bf16.xpose.msra.mxu0 0
        %518 = vmatprep.subr.bf16.mxu0 0
        %519 = vmatpush1.bf16.xpose.msra.mxu0 0
        %520 = vmatprep.subr.bf16.mxu0 0
        %521 = vmatpush1.bf16.xpose.msra.mxu0 0
        %522 = vmatprep.subr.bf16.mxu0 0
        %523 = vmatpush1.bf16.xpose.msra.mxu0 0
        %524 = vmatprep.subr.bf16.mxu0 0
        %525 = vmatpush1.bf16.xpose.msra.mxu0 0
        %526 = vmatprep.subr.bf16.mxu0 0
        %527 = vmatpush1.bf16.xpose.msra.mxu0 0
        %528 = vmatprep.subr.bf16.mxu0 0
        %529 = vmatpush1.bf16.xpose.msra.mxu0 0
        %530 = vmatprep.subr.bf16.mxu0 0
        %531 = vmatpush1.bf16.xpose.msra.mxu0 0
        %532 = vmatprep.subr.bf16.mxu0 0
        %533 = vmatpush1.bf16.xpose.msra.mxu0 0
        %534 = vmatprep.subr.bf16.mxu0 0
        %535 = vmatpush1.bf16.xpose.msra.mxu0 0
        %536 = vmatprep.subr.bf16.mxu0 0
        %537 = vmatpush1.bf16.xpose.msra.mxu0 0
        %538 = vmatprep.subr.bf16.mxu0 0
        %539 = vmatpush1.bf16.xpose.msra.mxu0 0
        %540 = vmatprep.subr.bf16.mxu0 0
        %541 = vmatpush1.bf16.xpose.msra.mxu0 0
        %542 = vmatprep.subr.bf16.mxu0 0
        %543 = vmatpush1.bf16.xpose.msra.mxu0 0
        %544 = vmatprep.subr.bf16.mxu0 0
        %545 = vmatpush1.bf16.xpose.msra.mxu0 0
        %546 = vmatprep.mubr.bf16.mxu0 0
        %547 = vmatmul.mubr.bf16.gmra.mrb[0].mxu0 %v509
        %v548 = vpop.f32.mrb[0].mxu0
        %v549 = vadd.f32 0.0, %v548
        %v550 = vpop.f32.mrb[0].mxu0
        %v551 = vpop.f32.mrb[0].mxu0
        %v552 = vpop.f32.mrb[0].mxu0
        %553 = vdwg.mxu0
        %v554 = vsel %vm275, %v549, -inf
        %555 = vmax.xlane.f32.xlu0 %v554
        %v556 = vpop.xlane.xlu0 %555
        %v557 = vsub.f32 %v549, %v556
        %v558 = vmul.f32 %v557, 1.442695
        %v559 = vpow.pop %v558
        %v560 = vsel %vm275, %v559, 0.0
        %561 = vadd.xlane.f32.xlu0 %v560
        %v562 = vpop.xlane.xlu0 %561
        %v563 = vrcp.pop %v562
        %v564 = vmul.f32 %v559, %v563
        %v565 = vpack.c.bf16 %v564, %v564
        %s566 = scalar_lea.vmem %s248, 8 [#allocation2]
        %567 = vst.msk [vmem:[%s566] sm:$0xf] %vm334, %v565
        %568 = vrot.lane.b32.xlu0 %v455, 112
        %v569 = vpop.permute.xlu0 %568
        %v571 = vsel %vm275, %v565, 0
        %v574 = vsel %vm339, %v569, 0
        %576 = vmatprep.subr.bf16.mxu0 0
        %577 = vmatpush1.bf16.msra.mxu0 %v574
        %578 = vmatprep.subr.bf16.mxu0 0
        %579 = vmatpush1.bf16.msra.mxu0 0
        %580 = vmatprep.subr.bf16.mxu0 0
        %581 = vmatpush1.bf16.msra.mxu0 0
        %582 = vmatprep.subr.bf16.mxu0 0
        %583 = vmatpush1.bf16.msra.mxu0 0
        %584 = vmatprep.subr.bf16.mxu0 0
        %585 = vmatpush1.bf16.msra.mxu0 0
        %586 = vmatprep.subr.bf16.mxu0 0
        %587 = vmatpush1.bf16.msra.mxu0 0
        %588 = vmatprep.subr.bf16.mxu0 0
        %589 = vmatpush1.bf16.msra.mxu0 0
        %590 = vmatprep.subr.bf16.mxu0 0
        %591 = vmatpush1.bf16.msra.mxu0 0
        %592 = vmatprep.subr.bf16.mxu0 0
        %593 = vmatpush1.bf16.msra.mxu0 0
        %594 = vmatprep.subr.bf16.mxu0 0
        %595 = vmatpush1.bf16.msra.mxu0 0
        %596 = vmatprep.subr.bf16.mxu0 0
        %597 = vmatpush1.bf16.msra.mxu0 0
        %598 = vmatprep.subr.bf16.mxu0 0
        %599 = vmatpush1.bf16.msra.mxu0 0
        %600 = vmatprep.subr.bf16.mxu0 0
        %601 = vmatpush1.bf16.msra.mxu0 0
        %602 = vmatprep.subr.bf16.mxu0 0
        %603 = vmatpush1.bf16.msra.mxu0 0
        %604 = vmatprep.subr.bf16.mxu0 0
        %605 = vmatpush1.bf16.msra.mxu0 0
        %606 = vmatprep.subr.bf16.mxu0 0
        %607 = vmatpush1.bf16.msra.mxu0 0
        %608 = vmatprep.mubr.bf16.mxu0 0
        %609 = vmatmul.mubr.bf16.gmra.mrb[0].mxu0 %v571
        %v610 = vpop.f32.mrb[0].mxu0
        %v611 = vadd.f32 0.0, %v610
        %v612 = vpop.f32.mrb[0].mxu0
        %v613 = vpop.f32.mrb[0].mxu0
        %v614 = vpop.f32.mrb[0].mxu0
        %615 = vdwg.mxu0
        %616 = vrot.lane.b32.xlu0 %v385, 104
        %v617 = vpop.permute.xlu0 %616
        %618 = vrot.lane.b32.xlu0 %v390, 104
        %v619 = vpop.permute.xlu0 %618
        %v621 = vsel %vm275, %v617, 0
        %v624 = vsel %vm275, %v619, 0
        %626 = vmatprep.subr.bf16.mxu0 0
        %627 = vmatpush1.bf16.xpose.msra.mxu0 %v624
        %628 = vmatprep.subr.bf16.mxu0 0
        %629 = vmatpush1.bf16.xpose.msra.mxu0 0
        %630 = vmatprep.subr.bf16.mxu0 0
        %631 = vmatpush1.bf16.xpose.msra.mxu0 0
        %632 = vmatprep.subr.bf16.mxu0 0
        %633 = vmatpush1.bf16.xpose.msra.mxu0 0
        %634 = vmatprep.subr.bf16.mxu0 0
        %635 = vmatpush1.bf16.xpose.msra.mxu0 0
        %636 = vmatprep.subr.bf16.mxu0 0
        %637 = vmatpush1.bf16.xpose.msra.mxu0 0
        %638 = vmatprep.subr.bf16.mxu0 0
        %639 = vmatpush1.bf16.xpose.msra.mxu0 0
        %640 = vmatprep.subr.bf16.mxu0 0
        %641 = vmatpush1.bf16.xpose.msra.mxu0 0
        %642 = vmatprep.subr.bf16.mxu0 0
        %643 = vmatpush1.bf16.xpose.msra.mxu0 0
        %644 = vmatprep.subr.bf16.mxu0 0
        %645 = vmatpush1.bf16.xpose.msra.mxu0 0
        %646 = vmatprep.subr.bf16.mxu0 0
        %647 = vmatpush1.bf16.xpose.msra.mxu0 0
        %648 = vmatprep.subr.bf16.mxu0 0
        %649 = vmatpush1.bf16.xpose.msra.mxu0 0
        %650 = vmatprep.subr.bf16.mxu0 0
        %651 = vmatpush1.bf16.xpose.msra.mxu0 0
        %652 = vmatprep.subr.bf16.mxu0 0
        %653 = vmatpush1.bf16.xpose.msra.mxu0 0
        %654 = vmatprep.subr.bf16.mxu0 0
        %655 = vmatpush1.bf16.xpose.msra.mxu0 0
        %656 = vmatprep.subr.bf16.mxu0 0
        %657 = vmatpush1.bf16.xpose.msra.mxu0 0
        %658 = vmatprep.mubr.bf16.mxu0 0
        %659 = vmatmul.mubr.bf16.gmra.mrb[0].mxu0 %v621
        %v660 = vpop.f32.mrb[0].mxu0
        %v661 = vadd.f32 0.0, %v660
        %v662 = vpop.f32.mrb[0].mxu0
        %v663 = vpop.f32.mrb[0].mxu0
        %v664 = vpop.f32.mrb[0].mxu0
        %665 = vdwg.mxu0
        %v666 = vsel %vm275, %v661, -inf
        %667 = vmax.xlane.f32.xlu0 %v666
        %v668 = vpop.xlane.xlu0 %667
        %v669 = vsub.f32 %v661, %v668
        %v670 = vmul.f32 %v669, 1.442695
        %v671 = vpow.pop %v670
        %v672 = vsel %vm275, %v671, 0.0
        %673 = vadd.xlane.f32.xlu0 %v672
        %v674 = vpop.xlane.xlu0 %673
        %v675 = vrcp.pop %v674
        %v676 = vmul.f32 %v671, %v675
        %v677 = vpack.c.bf16 %v676, %v676
        %s678 = scalar_lea.vmem %s248, 12 [#allocation2]
        %679 = vst.msk [vmem:[%s678] sm:$0xf] %vm334, %v677
        %680 = vrot.lane.b32.xlu0 %v455, 104
        %v681 = vpop.permute.xlu0 %680
        %v683 = vsel %vm275, %v677, 0
        %v686 = vsel %vm339, %v681, 0
        %688 = vmatprep.subr.bf16.mxu0 0
        %689 = vmatpush1.bf16.msra.mxu0 %v686
        %690 = vmatprep.subr.bf16.mxu0 0
        %691 = vmatpush1.bf16.msra.mxu0 0
        %692 = vmatprep.subr.bf16.mxu0 0
        %693 = vmatpush1.bf16.msra.mxu0 0
        %694 = vmatprep.subr.bf16.mxu0 0
        %695 = vmatpush1.bf16.msra.mxu0 0
        %696 = vmatprep.subr.bf16.mxu0 0
        %697 = vmatpush1.bf16.msra.mxu0 0
        %698 = vmatprep.subr.bf16.mxu0 0
        %699 = vmatpush1.bf16.msra.mxu0 0
        %700 = vmatprep.subr.bf16.mxu0 0
        %701 = vmatpush1.bf16.msra.mxu0 0
        %702 = vmatprep.subr.bf16.mxu0 0
        %703 = vmatpush1.bf16.msra.mxu0 0
        %704 = vmatprep.subr.bf16.mxu0 0
        %705 = vmatpush1.bf16.msra.mxu0 0
        %706 = vmatprep.subr.bf16.mxu0 0
        %707 = vmatpush1.bf16.msra.mxu0 0
        %708 = vmatprep.subr.bf16.mxu0 0
        %709 = vmatpush1.bf16.msra.mxu0 0
        %710 = vmatprep.subr.bf16.mxu0 0
        %711 = vmatpush1.bf16.msra.mxu0 0
        %712 = vmatprep.subr.bf16.mxu0 0
        %713 = vmatpush1.bf16.msra.mxu0 0
        %714 = vmatprep.subr.bf16.mxu0 0
        %715 = vmatpush1.bf16.msra.mxu0 0
        %716 = vmatprep.subr.bf16.mxu0 0
        %717 = vmatpush1.bf16.msra.mxu0 0
        %718 = vmatprep.subr.bf16.mxu0 0
        %719 = vmatpush1.bf16.msra.mxu0 0
        %720 = vmatprep.mubr.bf16.mxu0 0
        %721 = vmatmul.mubr.bf16.gmra.mrb[0].mxu0 %v683
        %v722 = vpop.f32.mrb[0].mxu0
        %v723 = vadd.f32 0.0, %v722
        %v724 = vpop.f32.mrb[0].mxu0
        %v725 = vpop.f32.mrb[0].mxu0
        %v726 = vpop.f32.mrb[0].mxu0
        %727 = vdwg.mxu0
        %729 = vrot.lane.b32.xlu0 %v499, 8
        %v730 = vpop.permute.xlu0 %729
        %733 = vrot.lane.b32.xlu0 %v611, 16
        %v734 = vpop.permute.xlu0 %733
        %737 = vrot.lane.b32.xlu0 %v723, 24
        %v738 = vpop.permute.xlu0 %737
        %v740 = vsel %vm275, %v378, %v730
        %vm741 = vcmask 130048
        %v742 = vsel %vm741, %v740, %v734
        %vm743 = vcmask 195584
        %v744 = vsel %vm743, %v742, %v738
        %v745 = vpack.c.bf16 %v744, %v744
        %vm746 = vcmask 257024
        %747 = vst.msk [vmem:[%s270] sm:$0xf] %vm746, %v745
        %p748 = scmp.lt.s32.totalorder %s23, 1
        %s749 = scalar_select %p748, %s23, 1
        %p750 = scmp.lt.s32.totalorder %s24, 0
        %s751 = scalar_select %p750, %s24, 0
        %s752 = sadd.s32 %s751, %s749
        %s753 = smul.addr %s752, 4
        %s754 = scalar_lea.vmem %s3, %s753
        %s755 = sand.u32 %s149, 1
        %s756 = scalar_lea.sflag [#allocation3], %s755
        %s757 = sand.u32 %s149, 1
        %s758 = smul.addr %s757, 16
        %s759 = scalar_lea.vmem [#allocation2], %s758
        // Predicated region
        $region33: #{attention_layer_forward.8} parent=31 // pred_check
          %p760 = pneg %p131
        $region34: #{attention_layer_forward.8} parent=31 // pred_check_branch
          %762 = sbr.rel (%p760) target = $region36
        $region35: #{attention_layer_forward.8} parent=31 // pred_region
          _
        $region36: #{attention_layer_forward.8} parent=31 // pred_fallthru
          _
        // Predicated region
        $region37: #{attention_layer_forward.8} parent=31 // pred_check
          %p763 = pneg %p159
        $region38: #{attention_layer_forward.8} parent=31 // pred_check_branch
          %765 = sbr.rel (%p763) target = $region40
        $region39: #{attention_layer_forward.8} parent=31 // pred_region
          %s767 = ssub.s32 256, 256
          %768 = vsyncadd %s756, %s767
          %s769 = smul.addr %s23, 4
          %s770 = sadd.s32 %s24, %s769
          %s771 = smul.addr %s770, 64
          %s772 = scalar_lea.hbm %s4, %s771
          %s773 = sshll.u32 %s759, 4
          %s774 = int_to_ptr.vmem [resolvable:$true] %s773
          %779 = dma.vmem_to_hbm [thread:$0]  %s774, 256, %s772, %s756, 64, 64, 4
        $region40: #{attention_layer_forward.8} parent=31 // pred_fallthru
          _
      $region32: #{attention_layer_forward.8} parent=5 // pred_fallthru
        _
      %p780 = scmp.le.s32.totalorder 2, %s14
      // Predicated region
      $region41: #{attention_layer_forward.8} parent=5 // pred_check
        %p781 = pneg %p780
      $region42: #{attention_layer_forward.8} parent=5 // pred_check_branch
        %783 = sbr.rel (%p781) target = $region44
      $region43: #{attention_layer_forward.8} parent=5 // pred_region
        %s784 = ssub.s32 %s14, 2
        // Predicated region
        $region45: #{attention_layer_forward.8} parent=43 // pred_check
          %p785 = pneg %p137
        $region46: #{attention_layer_forward.8} parent=43 // pred_check_branch
          %787 = sbr.rel (%p785) target = $region48
        $region47: #{attention_layer_forward.8} parent=43 // pred_region
          %p788 = scmp.lt.s32.totalorder %s25, 1
          %s789 = scalar_select %p788, %s25, 1
          %p790 = scmp.lt.s32.totalorder %s26, 0
          %s791 = scalar_select %p790, %s26, 0
          %s792 = sadd.s32 %s791, %s789
          %s793 = smul.addr %s792, 4
          %s794 = scalar_lea.vmem %s3, %s793
        $region48: #{attention_layer_forward.8} parent=43 // pred_fallthru
          _
        // Predicated region
        $region49: #{attention_layer_forward.8} parent=43 // pred_check
          %p795 = pneg %p165
        $region50: #{attention_layer_forward.8} parent=43 // pred_check_branch
          %797 = sbr.rel (%p795) target = $region52
        $region51: #{attention_layer_forward.8} parent=43 // pred_region
          %s798 = sand.u32 %s150, 1
          %s799 = scalar_lea.sflag [#allocation3], %s798
          %s800 = sand.u32 %s150, 1
          %s801 = smul.addr %s800, 16
          %s802 = scalar_lea.vmem [#allocation2], %s801
          %803 = dma.done %s799, 256
        $region52: #{attention_layer_forward.8} parent=43 // pred_fallthru
          _
      $region44: #{attention_layer_forward.8} parent=5 // pred_fallthru
        _
    $region6: #{attention_layer_forward.8} parent=1 // loop_footer
      %s18 = sadd.s32 1, %s14
    $region7: #{attention_layer_forward.8} parent=1 // loop_footer_branch
      %13 = sbr.rel target = $region3
    $region8: #{attention_layer_forward.8} parent=1 // loop_exit
      _
    %804 = vsyncpa [#allocation3], 1
    %s805 = scalar_lea.sflag [#allocation3], 1
    %806 = vsyncpa %s805, 1

</llo_original>
